<compile_context>
chip_gen: v7x
topology: tpu7x:2x2x1
jax: 0.10.0
libtpu: 0.0.40
codegen_flags: <defaults>
</compile_context>

<pallas_src>
import numpy as np
import jax
import jax.numpy as jnp
from jax.experimental import pallas as pl
from jax.experimental.pallas import tpu as pltpu

LANE = 128                       # vreg lane width
SUBLANE = 16                     # bf16-friendly sublane multiple
VMEM_LIMIT = 48 * 1024 * 1024    # explicit scoped-VMEM budget (safe on v5e/v6e/v7x)


def _round_up(x, m):
    return ((x + m - 1) // m) * m


# ----------------------------------------------------------------------------
# Pallas kernels
# ----------------------------------------------------------------------------
def _matmul_lrelu_stats_kernel(w_ref, p_ref, act_ref, sum_ref, ssq_ref):
    """Pass 1: (OC, Kd) @ (Kd, TR) on the MXU -> LeakyReLU -> per-tile channel stats."""
    w = w_ref[0]                                                 # (OCp, Kdp)  bf16
    pt = p_ref[0]                                                # (Kdp, TR)   bf16
    acc = jnp.dot(w, pt, preferred_element_type=jnp.float32)     # (OCp, TR)   f32
    act = jnp.where(acc >= 0, acc, jnp.float32(0.2) * acc)       # LeakyReLU(0.2)
    act_ref[...] = act[None]
    sum_ref[...] = jnp.sum(act, axis=1, keepdims=True)[None, None]
    ssq_ref[...] = jnp.sum(act * act, axis=1, keepdims=True)[None, None]


def _bn_apply_kernel(a_ref, scale_ref, shift_ref, o_ref):
    """Pass 2: out = act * scale + shift (mean/var/gamma/beta folded into scale/shift)."""
    o_ref[...] = a_ref[...] * scale_ref[...] + shift_ref[...]


def _pass1(wmat, pmat, row_tile):
    P, OCp, Kdp = wmat.shape
    _, _, Rp = pmat.shape
    T = Rp // row_tile
    return pl.pallas_call(
        _matmul_lrelu_stats_kernel,
        out_shape=(
            jax.ShapeDtypeStruct((P, OCp, Rp), jnp.float32),       # activations
            jax.ShapeDtypeStruct((P, T, OCp, 1), jnp.float32),     # per-tile sum
            jax.ShapeDtypeStruct((P, T, OCp, 1), jnp.float32),     # per-tile sum of sq
        ),
        grid=(P, T),
        in_specs=[
            pl.BlockSpec((1, OCp, Kdp), lambda ph, r: (ph, 0, 0)),      # weight (per phase)
            pl.BlockSpec((1, Kdp, row_tile), lambda ph, r: (ph, 0, r)),  # patch tile
        ],
        out_specs=(
            pl.BlockSpec((1, OCp, row_tile), lambda ph, r: (ph, 0, r)),
            pl.BlockSpec((1, 1, OCp, 1), lambda ph, r: (ph, r, 0, 0)),
            pl.BlockSpec((1, 1, OCp, 1), lambda ph, r: (ph, r, 0, 0)),
        ),
        compiler_params=pltpu.CompilerParams(
            dimension_semantics=("parallel", "parallel"),
            vmem_limit_bytes=VMEM_LIMIT),
    )(wmat, pmat)


def _pass2(act, scale, shift, row_tile):
    P, OCp, Rp = act.shape
    T = Rp // row_tile
    return pl.pallas_call(
        _bn_apply_kernel,
        out_shape=jax.ShapeDtypeStruct((P, OCp, Rp), jnp.float32),
        grid=(P, T),
        in_specs=[
            pl.BlockSpec((1, OCp, row_tile), lambda ph, r: (ph, 0, r)),
            pl.BlockSpec((1, OCp, 1), lambda ph, r: (0, 0, 0)),   # grid-invariant
            pl.BlockSpec((1, OCp, 1), lambda ph, r: (0, 0, 0)),   # grid-invariant
        ],
        out_specs=pl.BlockSpec((1, OCp, row_tile), lambda ph, r: (ph, 0, r)),
        compiler_params=pltpu.CompilerParams(
            dimension_semantics=("parallel", "parallel"),
            vmem_limit_bytes=VMEM_LIMIT),
    )(act, scale, shift)


# ----------------------------------------------------------------------------
# Glue: patch/weight matrix construction (lane-major, channels-major layout)
# ----------------------------------------------------------------------------
def _choose_row_tile(Kdp, R):
    # ~2 MiB bf16 patch tile; lanes clamped to [128, 2048], multiple of 128.
    budget = (2 * 1024 * 1024) // (2 * Kdp)
    tr = max(LANE, min(2048, (budget // LANE) * LANE))
    if R <= tr:
        tr = _round_up(R, LANE)
    return tr, _round_up(R, tr)


def _build_generic(x, w, k, s, p):
    """Generic ConvTranspose2d as zero-upsample + pad + flipped-kernel im2col.

    x: channels-major (C, N, H, W); w: PyTorch layout (C_in, C_out, k, k).
    Returns patches (1, k*k*C, R), weights (1, OC, k*k*C), R = N*OH*OW.
    """
    C, N, H, W = x.shape
    OC = w.shape[1]
    if s > 1:
        uh, uw = H * s - (s - 1), W * s - (s - 1)
        up = jnp.zeros((C, N, uh, uw), x.dtype).at[:, :, ::s, ::s].set(x)
    else:
        up = x
    pad = k - 1 - p
    up = jnp.pad(up, ((0, 0), (0, 0), (pad, pad), (pad, pad)))
    OH, OW = up.shape[2] - k + 1, up.shape[3] - k + 1
    R = N * OH * OW
    # lane-major patch matrix: concat shifted views along the row (sublane) axis.
    views = [up[:, :, kh:kh + OH, kw:kw + OW].reshape(C, R)
             for kh in range(k) for kw in range(k)]
    pat = jnp.concatenate(views, axis=0)[None]                         # (1, k*k*C, R)
    wflip = w[:, :, ::-1, ::-1]                                        # (C, OC, k, k)
    wmat = jnp.transpose(wflip, (1, 2, 3, 0)).reshape(OC, k * k * C)[None]
    return pat, wmat, (OH, OW)


def _build_subpixel_s2(x, w):
    """ConvTranspose2d(k=4, s=2, p=1) as 4 output-phase 2x2 convolutions.

    Avoids multiplying the 75% structural zeros of the zero-upsampled input.
    Returns patches (4, 4*C, R) and weights (4, OC, 4*C), R = N*H*W per phase.
    """
    C, N, H, W = x.shape
    OC = w.shape[1]
    xp = jnp.pad(x, ((0, 0), (0, 0), (1, 1), (1, 1)))
    R = N * H * W
    pats, wmats = [], []
    for a in range(2):            # output row parity
        for b in range(2):        # output col parity
            views, taps = [], []
            for jh in range(2):
                for jw in range(2):
                    views.append(
                        xp[:, :, a + jh:a + jh + H, b + jw:b + jw + W].reshape(C, R))
                    taps.append((3 - a - 2 * jh, 3 - b - 2 * jw))
            pats.append(jnp.concatenate(views, axis=0))                   # (4*C, R)
            wsel = jnp.stack([w[:, :, kh, kw] for kh, kw in taps], axis=0)  # (4, C, OC)
            wmats.append(jnp.transpose(wsel, (2, 0, 1)).reshape(OC, 4 * C))
    return jnp.stack(pats, axis=0), jnp.stack(wmats, axis=0), (H, W)


# ----------------------------------------------------------------------------
# One fused layer: ConvTranspose2d -> LeakyReLU(0.2) -> BatchNorm2d (train mode)
# ----------------------------------------------------------------------------
def deconv_lrelu_bn_layer(x, w, gamma, beta, k, s, p):
    """x: channels-major (C, N, H, W) -> (OC, N, OH, OW)."""
    _, N, H, W = x.shape
    OC = w.shape[1]
    subpixel = (k == 4 and s == 2 and p == 1)
    if subpixel:
        pat, wmat, (ph_h, ph_w) = _build_subpixel_s2(x, w)
        OH, OW = 2 * ph_h, 2 * ph_w
    else:
        pat, wmat, (OH, OW) = _build_generic(x, w, k, s, p)
    P, Kd, R = pat.shape

    Kdp = _round_up(Kd, SUBLANE)
    OCp = _round_up(OC, SUBLANE)
    row_tile, Rp = _choose_row_tile(Kdp, R)

    # zero-pad to TPU-friendly shapes (zeros contribute nothing to BN stats),
    # bf16 operands for the MXU (f32 accumulation happens in-kernel).
    pat = jnp.pad(pat, ((0, 0), (0, Kdp - Kd), (0, Rp - R))).astype(jnp.bfloat16)
    wmat = jnp.pad(wmat, ((0, 0), (0, OCp - OC), (0, Kdp - Kd))).astype(jnp.bfloat16)

    # ---- pass 1: matmul + LeakyReLU + per-tile per-channel statistics ----
    act, part_sum, part_ssq = _pass1(wmat, pat, row_tile)

    # ---- global BatchNorm statistics (training mode, biased variance) ----
    count = float(P * R)                                   # = N * OH * OW per channel
    total = jnp.sum(part_sum, axis=(0, 1, 3))              # (OCp,)
    total_sq = jnp.sum(part_ssq, axis=(0, 1, 3))           # (OCp,)
    mean = total / count
    var = jnp.maximum(total_sq / count - mean * mean, 0.0)
    g = jnp.pad(gamma, (0, OCp - OC))
    b_ = jnp.pad(beta, (0, OCp - OC))
    scale = g * jax.lax.rsqrt(var + jnp.float32(1e-5))
    shift = b_ - mean * scale
    scale = scale.reshape(1, OCp, 1).astype(jnp.float32)
    shift = shift.reshape(1, OCp, 1).astype(jnp.float32)

    # ---- pass 2: normalize (single fused multiply-add per element) ----
    y = _pass2(act, scale, shift, row_tile)[:, :OC, :R]    # strip channel/row padding

    if subpixel:
        y = y.reshape(4, OC, N, ph_h, ph_w)
        out = jnp.zeros((OC, N, OH, OW), y.dtype)
        t = 0
        for a in range(2):
            for b in range(2):
                out = out.at[:, :, a::2, b::2].set(y[t])
                t += 1
    else:
        out = y[0].reshape(OC, N, OH, OW)
    return out


# ----------------------------------------------------------------------------
# dc_root_generator: layer bookkeeping mirroring the PyTorch __init__
# ----------------------------------------------------------------------------
def build_layer_configs(nz, ngf, imgsize, max_n_channel=10000):
    depth = int(np.floor(np.log2(imgsize)))
    rest = imgsize - int(np.power(2, depth))
    if rest > 0:
        depth = int(depth + 1)
    configs = []
    out_ch = min(int(ngf * np.power(2, depth - 2)), max_n_channel)
    configs.append((nz, out_ch, 2, 1, 0))          # layer1: k=2, s=1, p=0
    for i in range(1, depth - 1):
        in_ch = out_ch
        out_ch = min(int(ngf * np.power(2, depth - 2 - i)), max_n_channel)
        configs.append((in_ch, out_ch, 4, 2, 1))   # layer i+1: k=4, s=2, p=1
    return configs


def init_params(key, configs):
    params = []
    for (in_ch, out_ch, k, _, _) in configs:
        key, k1, k2, k3 = jax.random.split(key, 4)
        w = jax.random.normal(k1, (in_ch, out_ch, k, k), jnp.float32) * 0.05
        gamma = 1.0 + 0.1 * jax.random.normal(k2, (out_ch,), jnp.float32)
        beta = 0.1 * jax.random.normal(k3, (out_ch,), jnp.float32)
        params.append((w, gamma, beta))
    return params


def dc_root_generator_forward(z_nchw, configs, params):
    x = jnp.transpose(z_nchw, (1, 0, 2, 3))        # -> channels-major (C, N, H, W)
    for (in_ch, out_ch, k, s, p), (w, gamma, beta) in zip(configs, params):
        x = deconv_lrelu_bn_layer(x, w, gamma, beta, k, s, p)
    return jnp.transpose(x, (1, 0, 2, 3))          # back to NCHW (PyTorch layout)


# Pure-XLA reference used only for the correctness self-check.
def reference_forward(z_nchw, configs, params):
    x = z_nchw
    for (in_ch, out_ch, k, s, p), (w, gamma, beta) in zip(configs, params):
        wconv = jnp.transpose(w[:, :, ::-1, ::-1], (1, 0, 2, 3))   # (OC, IC, k, k)
        y = jax.lax.conv_general_dilated(
            x, wconv, window_strides=(1, 1),
            padding=[(k - 1 - p, k - 1 - p)] * 2,
            lhs_dilation=(s, s),
            dimension_numbers=("NCHW", "OIHW", "NCHW"))
        y = jnp.where(y >= 0, y, 0.2 * y)
        mean = jnp.mean(y, axis=(0, 2, 3), keepdims=True)
        var = jnp.mean((y - mean) ** 2, axis=(0, 2, 3), keepdims=True)
        x = ((y - mean) * jax.lax.rsqrt(var + 1e-5)
             * gamma.reshape(1, -1, 1, 1) + beta.reshape(1, -1, 1, 1))
    return x


# ----------------------------------------------------------------------------
if __name__ == "__main__":
    # Small deterministic configuration: latent (batch, nz, 1, 1), DCGAN-style.
    batch, nz, ngf, imgsize = 2, 8, 4, 16          # depth=4 -> 3 deconv layers
    key = jax.random.PRNGKey(0)
    key, zkey = jax.random.split(key)
    z = jax.random.normal(zkey, (batch, nz, 1, 1), jnp.float32)

    configs = build_layer_configs(nz, ngf, imgsize)
    params = init_params(key, configs)

    fwd = jax.jit(lambda z_, p_: dc_root_generator_forward(z_, configs, p_))
    out = jax.block_until_ready(fwd(z, params))

    # Expected output: (batch, ngf, 2**(depth-1), 2**(depth-1)) = (2, 4, 8, 8)
    assert out.shape == (batch, ngf, 8, 8), out.shape
    assert bool(jnp.all(jnp.isfinite(out)))

    # Self-check vs. a pure-XLA reference (bf16 MXU operands -> loose tolerance).
    ref = reference_forward(z, configs, params)
    assert bool(jnp.allclose(out, ref, rtol=5e-2, atol=5e-2)), \
        float(jnp.max(jnp.abs(out - ref)))

    print("KERNEL_OK")
</pallas_src>

<mosaic_0001>
module attributes {stable_mosaic.version = 11 : i64} {
  func.func @_matmul_lrelu_stats_kernel(%arg0: i32, %arg1: i32, %arg2: memref<1x16x32xbf16, #tpu.memory_space<vmem>>, %arg3: memref<1x32x128xbf16, #tpu.memory_space<vmem>>, %arg4: memref<1x16x128xf32, #tpu.memory_space<vmem>>, %arg5: memref<1x1x16x1xf32, #tpu.memory_space<vmem>>, %arg6: memref<1x1x16x1xf32, #tpu.memory_space<vmem>>) attributes {dimension_semantics = [#tpu.dimension_semantics<parallel>, #tpu.dimension_semantics<parallel>], iteration_bounds = array<i64: 1, 1>, scalar_prefetch = 0 : i64, scratch_operands = 0 : i64, tpu.core_type = #tpu.core_type<tc>, window_params = [{transform_indices = @transform_0, window_bounds = array<i64: 1, 16, 32>}, {transform_indices = @transform_1, window_bounds = array<i64: 1, 32, 128>}, {transform_indices = @transform_2, window_bounds = array<i64: 1, 16, 128>}, {transform_indices = @transform_3, window_bounds = array<i64: 1, 1, 16, 1>}, {transform_indices = @transform_4, window_bounds = array<i64: 1, 1, 16, 1>}]} {
    %c0 = arith.constant 0 : index
    %c0_0 = arith.constant 0 : index
    %c0_1 = arith.constant 0 : index
    %0 = vector.load %arg2[%c0, %c0_0, %c0_1] : memref<1x16x32xbf16, #tpu.memory_space<vmem>>, vector<1x16x32xbf16>
    %1 = vector.shape_cast %0 : vector<1x16x32xbf16> to vector<16x32xbf16>
    %c0_2 = arith.constant 0 : index
    %c0_3 = arith.constant 0 : index
    %c0_4 = arith.constant 0 : index
    %2 = vector.load %arg3[%c0_2, %c0_3, %c0_4] : memref<1x32x128xbf16, #tpu.memory_space<vmem>>, vector<1x32x128xbf16>
    %3 = vector.shape_cast %2 : vector<1x32x128xbf16> to vector<32x128xbf16>
    %cst = arith.constant dense<0.000000e+00> : vector<16x128xf32>
    %4 = tpu.matmul %1, %3, %cst {dimension_numbers = #tpu.dot_dimension_numbers<[1], [0], [0], [1], [0, 0, 1, 1], [], []>} : vector<16x32xbf16>, vector<32x128xbf16>, vector<16x128xf32> -> vector<16x128xf32>
    %cst_5 = arith.constant 0.000000e+00 : f32
    %5 = vector.broadcast %cst_5 : f32 to vector<16x128xf32>
    %6 = arith.cmpf oge, %4, %5 : vector<16x128xf32>
    %cst_6 = arith.constant 2.000000e-01 : f32
    %7 = vector.broadcast %cst_6 : f32 to vector<16x128xf32>
    %8 = arith.mulf %7, %4 : vector<16x128xf32>
    %9 = arith.select %6, %4, %8 : vector<16x128xi1>, vector<16x128xf32>
    %10 = vector.shape_cast %9 : vector<16x128xf32> to vector<1x16x128xf32>
    %c0_7 = arith.constant 0 : index
    %c0_8 = arith.constant 0 : index
    %c0_9 = arith.constant 0 : index
    %11 = vector.load %arg4[%c0_7, %c0_8, %c0_9] : memref<1x16x128xf32, #tpu.memory_space<vmem>>, vector<1x16x128xf32>
    tpu.vector_store %arg4[%c0_7, %c0_8, %c0_9], %10 {strides = array<i32>} : memref<1x16x128xf32, #tpu.memory_space<vmem>>, vector<1x16x128xf32>,
    %cst_10 = arith.constant dense<0.000000e+00> : vector<16xf32>
    %12 = vector.multi_reduction <add>, %9, %cst_10 [1] : vector<16x128xf32> to vector<16xf32>
    %13 = vector.shape_cast %12 : vector<16xf32> to vector<16x1xf32>
    %14 = vector.shape_cast %13 : vector<16x1xf32> to vector<1x1x16x1xf32>
    %c0_11 = arith.constant 0 : index
    %c0_12 = arith.constant 0 : index
    %c0_13 = arith.constant 0 : index
    %c0_14 = arith.constant 0 : index
    %15 = vector.load %arg5[%c0_11, %c0_12, %c0_13, %c0_14] : memref<1x1x16x1xf32, #tpu.memory_space<vmem>>, vector<1x1x16x1xf32>
    tpu.vector_store %arg5[%c0_11, %c0_12, %c0_13, %c0_14], %14 {strides = array<i32>} : memref<1x1x16x1xf32, #tpu.memory_space<vmem>>, vector<1x1x16x1xf32>,
    %16 = arith.mulf %9, %9 : vector<16x128xf32>
    %cst_15 = arith.constant dense<0.000000e+00> : vector<16xf32>
    %17 = vector.multi_reduction <add>, %16, %cst_15 [1] : vector<16x128xf32> to vector<16xf32>
    %18 = vector.shape_cast %17 : vector<16xf32> to vector<16x1xf32>
    %19 = vector.shape_cast %18 : vector<16x1xf32> to vector<1x1x16x1xf32>
    %c0_16 = arith.constant 0 : index
    %c0_17 = arith.constant 0 : index
    %c0_18 = arith.constant 0 : index
    %c0_19 = arith.constant 0 : index
    %20 = vector.load %arg6[%c0_16, %c0_17, %c0_18, %c0_19] : memref<1x1x16x1xf32, #tpu.memory_space<vmem>>, vector<1x1x16x1xf32>
    tpu.vector_store %arg6[%c0_16, %c0_17, %c0_18, %c0_19], %19 {strides = array<i32>} : memref<1x1x16x1xf32, #tpu.memory_space<vmem>>, vector<1x1x16x1xf32>,
    return
  }
  func.func @transform_0(%arg0: i32, %arg1: i32) -> (i32, i32, i32) {
    %c0_i32 = arith.constant 0 : i32
    %c0_i32_0 = arith.constant 0 : i32
    %c0_i32_1 = arith.constant 0 : i32
    return %arg0, %c0_i32, %c0_i32_0 : i32, i32, i32
  }
  func.func @transform_1(%arg0: i32, %arg1: i32) -> (i32, i32, i32) {
    %c0_i32 = arith.constant 0 : i32
    %c0_i32_0 = arith.constant 0 : i32
    return %arg0, %c0_i32, %arg1 : i32, i32, i32
  }
  func.func @transform_2(%arg0: i32, %arg1: i32) -> (i32, i32, i32) {
    %c0_i32 = arith.constant 0 : i32
    %c0_i32_0 = arith.constant 0 : i32
    return %arg0, %c0_i32, %arg1 : i32, i32, i32
  }
  func.func @transform_3(%arg0: i32, %arg1: i32) -> (i32, i32, i32, i32) {
    %c0_i32 = arith.constant 0 : i32
    %c0_i32_0 = arith.constant 0 : i32
    %c0_i32_1 = arith.constant 0 : i32
    return %arg0, %arg1, %c0_i32, %c0_i32_0 : i32, i32, i32, i32
  }
  func.func @transform_4(%arg0: i32, %arg1: i32) -> (i32, i32, i32, i32) {
    %c0_i32 = arith.constant 0 : i32
    %c0_i32_0 = arith.constant 0 : i32
    %c0_i32_1 = arith.constant 0 : i32
    return %arg0, %arg1, %c0_i32, %c0_i32_0 : i32, i32, i32, i32
  }
}

module attributes {stable_mosaic.version = 11 : i64} {
  func.func @_bn_apply_kernel(%arg0: i32, %arg1: i32, %arg2: memref<1x16x128xf32, #tpu.memory_space<vmem>>, %arg3: memref<1x16x1xf32, #tpu.memory_space<vmem>>, %arg4: memref<1x16x1xf32, #tpu.memory_space<vmem>>, %arg5: memref<1x16x128xf32, #tpu.memory_space<vmem>>) attributes {dimension_semantics = [#tpu.dimension_semantics<parallel>, #tpu.dimension_semantics<parallel>], iteration_bounds = array<i64: 1, 1>, scalar_prefetch = 0 : i64, scratch_operands = 0 : i64, tpu.core_type = #tpu.core_type<tc>, window_params = [{transform_indices = @transform_0, window_bounds = array<i64: 1, 16, 128>}, {pipeline_mode = #tpu.pipeline_mode<synchronous>, transform_indices = @transform_1, window_bounds = array<i64: 1, 16, 1>}, {pipeline_mode = #tpu.pipeline_mode<synchronous>, transform_indices = @transform_2, window_bounds = array<i64: 1, 16, 1>}, {transform_indices = @transform_3, window_bounds = array<i64: 1, 16, 128>}]} {
    %c0 = arith.constant 0 : index
    %c0_0 = arith.constant 0 : index
    %c0_1 = arith.constant 0 : index
    %0 = vector.load %arg2[%c0, %c0_0, %c0_1] : memref<1x16x128xf32, #tpu.memory_space<vmem>>, vector<1x16x128xf32>
    %c0_2 = arith.constant 0 : index
    %c0_3 = arith.constant 0 : index
    %c0_4 = arith.constant 0 : index
    %1 = vector.load %arg3[%c0_2, %c0_3, %c0_4] : memref<1x16x1xf32, #tpu.memory_space<vmem>>, vector<1x16x1xf32>
    %2 = vector.broadcast %1 : vector<1x16x1xf32> to vector<1x16x128xf32>
    %3 = arith.mulf %0, %2 : vector<1x16x128xf32>
    %c0_5 = arith.constant 0 : index
    %c0_6 = arith.constant 0 : index
    %c0_7 = arith.constant 0 : index
    %4 = vector.load %arg4[%c0_5, %c0_6, %c0_7] : memref<1x16x1xf32, #tpu.memory_space<vmem>>, vector<1x16x1xf32>
    %5 = vector.broadcast %4 : vector<1x16x1xf32> to vector<1x16x128xf32>
    %6 = arith.addf %3, %5 : vector<1x16x128xf32>
    %c0_8 = arith.constant 0 : index
    %c0_9 = arith.constant 0 : index
    %c0_10 = arith.constant 0 : index
    %7 = vector.load %arg5[%c0_8, %c0_9, %c0_10] : memref<1x16x128xf32, #tpu.memory_space<vmem>>, vector<1x16x128xf32>
    tpu.vector_store %arg5[%c0_8, %c0_9, %c0_10], %6 {strides = array<i32>} : memref<1x16x128xf32, #tpu.memory_space<vmem>>, vector<1x16x128xf32>,
    return
  }
  func.func @transform_0(%arg0: i32, %arg1: i32) -> (i32, i32, i32) {
    %c0_i32 = arith.constant 0 : i32
    %c0_i32_0 = arith.constant 0 : i32
    return %arg0, %c0_i32, %arg1 : i32, i32, i32
  }
  func.func @transform_1(%arg0: i32, %arg1: i32) -> (i32, i32, i32) {
    %c0_i32 = arith.constant 0 : i32
    %c0_i32_0 = arith.constant 0 : i32
    %c0_i32_1 = arith.constant 0 : i32
    %c0_i32_2 = arith.constant 0 : i32
    return %c0_i32, %c0_i32_0, %c0_i32_1 : i32, i32, i32
  }
  func.func @transform_2(%arg0: i32, %arg1: i32) -> (i32, i32, i32) {
    %c0_i32 = arith.constant 0 : i32
    %c0_i32_0 = arith.constant 0 : i32
    %c0_i32_1 = arith.constant 0 : i32
    %c0_i32_2 = arith.constant 0 : i32
    return %c0_i32, %c0_i32_0, %c0_i32_1 : i32, i32, i32
  }
  func.func @transform_3(%arg0: i32, %arg1: i32) -> (i32, i32, i32) {
    %c0_i32 = arith.constant 0 : i32
    %c0_i32_0 = arith.constant 0 : i32
    return %arg0, %c0_i32, %arg1 : i32, i32, i32
  }
}

module attributes {stable_mosaic.version = 11 : i64} {
  func.func @_matmul_lrelu_stats_kernel(%arg0: i32, %arg1: i32, %arg2: memref<1x16x64xbf16, #tpu.memory_space<vmem>>, %arg3: memref<1x64x128xbf16, #tpu.memory_space<vmem>>, %arg4: memref<1x16x128xf32, #tpu.memory_space<vmem>>, %arg5: memref<1x1x16x1xf32, #tpu.memory_space<vmem>>, %arg6: memref<1x1x16x1xf32, #tpu.memory_space<vmem>>) attributes {dimension_semantics = [#tpu.dimension_semantics<parallel>, #tpu.dimension_semantics<parallel>], iteration_bounds = array<i64: 4, 1>, scalar_prefetch = 0 : i64, scratch_operands = 0 : i64, tpu.core_type = #tpu.core_type<tc>, window_params = [{transform_indices = @transform_0, window_bounds = array<i64: 1, 16, 64>}, {transform_indices = @transform_1, window_bounds = array<i64: 1, 64, 128>}, {transform_indices = @transform_2, window_bounds = array<i64: 1, 16, 128>}, {transform_indices = @transform_3, window_bounds = array<i64: 1, 1, 16, 1>}, {transform_indices = @transform_4, window_bounds = array<i64: 1, 1, 16, 1>}]} {
    %c0 = arith.constant 0 : index
    %c0_0 = arith.constant 0 : index
    %c0_1 = arith.constant 0 : index
    %0 = vector.load %arg2[%c0, %c0_0, %c0_1] : memref<1x16x64xbf16, #tpu.memory_space<vmem>>, vector<1x16x64xbf16>
    %1 = vector.shape_cast %0 : vector<1x16x64xbf16> to vector<16x64xbf16>
    %c0_2 = arith.constant 0 : index
    %c0_3 = arith.constant 0 : index
    %c0_4 = arith.constant 0 : index
    %2 = vector.load %arg3[%c0_2, %c0_3, %c0_4] : memref<1x64x128xbf16, #tpu.memory_space<vmem>>, vector<1x64x128xbf16>
    %3 = vector.shape_cast %2 : vector<1x64x128xbf16> to vector<64x128xbf16>
    %cst = arith.constant dense<0.000000e+00> : vector<16x128xf32>
    %4 = tpu.matmul %1, %3, %cst {dimension_numbers = #tpu.dot_dimension_numbers<[1], [0], [0], [1], [0, 0, 1, 1], [], []>} : vector<16x64xbf16>, vector<64x128xbf16>, vector<16x128xf32> -> vector<16x128xf32>
    %cst_5 = arith.constant 0.000000e+00 : f32
    %5 = vector.broadcast %cst_5 : f32 to vector<16x128xf32>
    %6 = arith.cmpf oge, %4, %5 : vector<16x128xf32>
    %cst_6 = arith.constant 2.000000e-01 : f32
    %7 = vector.broadcast %cst_6 : f32 to vector<16x128xf32>
    %8 = arith.mulf %7, %4 : vector<16x128xf32>
    %9 = arith.select %6, %4, %8 : vector<16x128xi1>, vector<16x128xf32>
    %10 = vector.shape_cast %9 : vector<16x128xf32> to vector<1x16x128xf32>
    %c0_7 = arith.constant 0 : index
    %c0_8 = arith.constant 0 : index
    %c0_9 = arith.constant 0 : index
    %11 = vector.load %arg4[%c0_7, %c0_8, %c0_9] : memref<1x16x128xf32, #tpu.memory_space<vmem>>, vector<1x16x128xf32>
    tpu.vector_store %arg4[%c0_7, %c0_8, %c0_9], %10 {strides = array<i32>} : memref<1x16x128xf32, #tpu.memory_space<vmem>>, vector<1x16x128xf32>,
    %cst_10 = arith.constant dense<0.000000e+00> : vector<16xf32>
    %12 = vector.multi_reduction <add>, %9, %cst_10 [1] : vector<16x128xf32> to vector<16xf32>
    %13 = vector.shape_cast %12 : vector<16xf32> to vector<16x1xf32>
    %14 = vector.shape_cast %13 : vector<16x1xf32> to vector<1x1x16x1xf32>
    %c0_11 = arith.constant 0 : index
    %c0_12 = arith.constant 0 : index
    %c0_13 = arith.constant 0 : index
    %c0_14 = arith.constant 0 : index
    %15 = vector.load %arg5[%c0_11, %c0_12, %c0_13, %c0_14] : memref<1x1x16x1xf32, #tpu.memory_space<vmem>>, vector<1x1x16x1xf32>
    tpu.vector_store %arg5[%c0_11, %c0_12, %c0_13, %c0_14], %14 {strides = array<i32>} : memref<1x1x16x1xf32, #tpu.memory_space<vmem>>, vector<1x1x16x1xf32>,
    %16 = arith.mulf %9, %9 : vector<16x128xf32>
    %cst_15 = arith.constant dense<0.000000e+00> : vector<16xf32>
    %17 = vector.multi_reduction <add>, %16, %cst_15 [1] : vector<16x128xf32> to vector<16xf32>
    %18 = vector.shape_cast %17 : vector<16xf32> to vector<16x1xf32>
    %19 = vector.shape_cast %18 : vector<16x1xf32> to vector<1x1x16x1xf32>
    %c0_16 = arith.constant 0 : index
    %c0_17 = arith.constant 0 : index
    %c0_18 = arith.constant 0 : index
    %c0_19 = arith.constant 0 : index
    %20 = vector.load %arg6[%c0_16, %c0_17, %c0_18, %c0_19] : memref<1x1x16x1xf32, #tpu.memory_space<vmem>>, vector<1x1x16x1xf32>
    tpu.vector_store %arg6[%c0_16, %c0_17, %c0_18, %c0_19], %19 {strides = array<i32>} : memref<1x1x16x1xf32, #tpu.memory_space<vmem>>, vector<1x1x16x1xf32>,
    return
  }
  func.func @transform_0(%arg0: i32, %arg1: i32) -> (i32, i32, i32) {
    %c0_i32 = arith.constant 0 : i32
    %c0_i32_0 = arith.constant 0 : i32
    %c0_i32_1 = arith.constant 0 : i32
    return %arg0, %c0_i32, %c0_i32_0 : i32, i32, i32
  }
  func.func @transform_1(%arg0: i32, %arg1: i32) -> (i32, i32, i32) {
    %c0_i32 = arith.constant 0 : i32
    %c0_i32_0 = arith.constant 0 : i32
    return %arg0, %c0_i32, %arg1 : i32, i32, i32
  }
  func.func @transform_2(%arg0: i32, %arg1: i32) -> (i32, i32, i32) {
    %c0_i32 = arith.constant 0 : i32
    %c0_i32_0 = arith.constant 0 : i32
    return %arg0, %c0_i32, %arg1 : i32, i32, i32
  }
  func.func @transform_3(%arg0: i32, %arg1: i32) -> (i32, i32, i32, i32) {
    %c0_i32 = arith.constant 0 : i32
    %c0_i32_0 = arith.constant 0 : i32
    %c0_i32_1 = arith.constant 0 : i32
    return %arg0, %arg1, %c0_i32, %c0_i32_0 : i32, i32, i32, i32
  }
  func.func @transform_4(%arg0: i32, %arg1: i32) -> (i32, i32, i32, i32) {
    %c0_i32 = arith.constant 0 : i32
    %c0_i32_0 = arith.constant 0 : i32
    %c0_i32_1 = arith.constant 0 : i32
    return %arg0, %arg1, %c0_i32, %c0_i32_0 : i32, i32, i32, i32
  }
}

module attributes {stable_mosaic.version = 11 : i64} {
  func.func @_bn_apply_kernel(%arg0: i32, %arg1: i32, %arg2: memref<1x16x128xf32, #tpu.memory_space<vmem>>, %arg3: memref<1x16x1xf32, #tpu.memory_space<vmem>>, %arg4: memref<1x16x1xf32, #tpu.memory_space<vmem>>, %arg5: memref<1x16x128xf32, #tpu.memory_space<vmem>>) attributes {dimension_semantics = [#tpu.dimension_semantics<parallel>, #tpu.dimension_semantics<parallel>], iteration_bounds = array<i64: 4, 1>, scalar_prefetch = 0 : i64, scratch_operands = 0 : i64, tpu.core_type = #tpu.core_type<tc>, window_params = [{transform_indices = @transform_0, window_bounds = array<i64: 1, 16, 128>}, {pipeline_mode = #tpu.pipeline_mode<synchronous>, transform_indices = @transform_1, window_bounds = array<i64: 1, 16, 1>}, {pipeline_mode = #tpu.pipeline_mode<synchronous>, transform_indices = @transform_2, window_bounds = array<i64: 1, 16, 1>}, {transform_indices = @transform_3, window_bounds = array<i64: 1, 16, 128>}]} {
    %c0 = arith.constant 0 : index
    %c0_0 = arith.constant 0 : index
    %c0_1 = arith.constant 0 : index
    %0 = vector.load %arg2[%c0, %c0_0, %c0_1] : memref<1x16x128xf32, #tpu.memory_space<vmem>>, vector<1x16x128xf32>
    %c0_2 = arith.constant 0 : index
    %c0_3 = arith.constant 0 : index
    %c0_4 = arith.constant 0 : index
    %1 = vector.load %arg3[%c0_2, %c0_3, %c0_4] : memref<1x16x1xf32, #tpu.memory_space<vmem>>, vector<1x16x1xf32>
    %2 = vector.broadcast %1 : vector<1x16x1xf32> to vector<1x16x128xf32>
    %3 = arith.mulf %0, %2 : vector<1x16x128xf32>
    %c0_5 = arith.constant 0 : index
    %c0_6 = arith.constant 0 : index
    %c0_7 = arith.constant 0 : index
    %4 = vector.load %arg4[%c0_5, %c0_6, %c0_7] : memref<1x16x1xf32, #tpu.memory_space<vmem>>, vector<1x16x1xf32>
    %5 = vector.broadcast %4 : vector<1x16x1xf32> to vector<1x16x128xf32>
    %6 = arith.addf %3, %5 : vector<1x16x128xf32>
    %c0_8 = arith.constant 0 : index
    %c0_9 = arith.constant 0 : index
    %c0_10 = arith.constant 0 : index
    %7 = vector.load %arg5[%c0_8, %c0_9, %c0_10] : memref<1x16x128xf32, #tpu.memory_space<vmem>>, vector<1x16x128xf32>
    tpu.vector_store %arg5[%c0_8, %c0_9, %c0_10], %6 {strides = array<i32>} : memref<1x16x128xf32, #tpu.memory_space<vmem>>, vector<1x16x128xf32>,
    return
  }
  func.func @transform_0(%arg0: i32, %arg1: i32) -> (i32, i32, i32) {
    %c0_i32 = arith.constant 0 : i32
    %c0_i32_0 = arith.constant 0 : i32
    return %arg0, %c0_i32, %arg1 : i32, i32, i32
  }
  func.func @transform_1(%arg0: i32, %arg1: i32) -> (i32, i32, i32) {
    %c0_i32 = arith.constant 0 : i32
    %c0_i32_0 = arith.constant 0 : i32
    %c0_i32_1 = arith.constant 0 : i32
    %c0_i32_2 = arith.constant 0 : i32
    return %c0_i32, %c0_i32_0, %c0_i32_1 : i32, i32, i32
  }
  func.func @transform_2(%arg0: i32, %arg1: i32) -> (i32, i32, i32) {
    %c0_i32 = arith.constant 0 : i32
    %c0_i32_0 = arith.constant 0 : i32
    %c0_i32_1 = arith.constant 0 : i32
    %c0_i32_2 = arith.constant 0 : i32
    return %c0_i32, %c0_i32_0, %c0_i32_1 : i32, i32, i32
  }
  func.func @transform_3(%arg0: i32, %arg1: i32) -> (i32, i32, i32) {
    %c0_i32 = arith.constant 0 : i32
    %c0_i32_0 = arith.constant 0 : i32
    return %arg0, %c0_i32, %arg1 : i32, i32, i32
  }
}

module attributes {stable_mosaic.version = 11 : i64} {
  func.func @_matmul_lrelu_stats_kernel(%arg0: i32, %arg1: i32, %arg2: memref<1x16x32xbf16, #tpu.memory_space<vmem>>, %arg3: memref<1x32x128xbf16, #tpu.memory_space<vmem>>, %arg4: memref<1x16x128xf32, #tpu.memory_space<vmem>>, %arg5: memref<1x1x16x1xf32, #tpu.memory_space<vmem>>, %arg6: memref<1x1x16x1xf32, #tpu.memory_space<vmem>>) attributes {dimension_semantics = [#tpu.dimension_semantics<parallel>, #tpu.dimension_semantics<parallel>], iteration_bounds = array<i64: 4, 1>, scalar_prefetch = 0 : i64, scratch_operands = 0 : i64, tpu.core_type = #tpu.core_type<tc>, window_params = [{transform_indices = @transform_0, window_bounds = array<i64: 1, 16, 32>}, {transform_indices = @transform_1, window_bounds = array<i64: 1, 32, 128>}, {transform_indices = @transform_2, window_bounds = array<i64: 1, 16, 128>}, {transform_indices = @transform_3, window_bounds = array<i64: 1, 1, 16, 1>}, {transform_indices = @transform_4, window_bounds = array<i64: 1, 1, 16, 1>}]} {
    %c0 = arith.constant 0 : index
    %c0_0 = arith.constant 0 : index
    %c0_1 = arith.constant 0 : index
    %0 = vector.load %arg2[%c0, %c0_0, %c0_1] : memref<1x16x32xbf16, #tpu.memory_space<vmem>>, vector<1x16x32xbf16>
    %1 = vector.shape_cast %0 : vector<1x16x32xbf16> to vector<16x32xbf16>
    %c0_2 = arith.constant 0 : index
    %c0_3 = arith.constant 0 : index
    %c0_4 = arith.constant 0 : index
    %2 = vector.load %arg3[%c0_2, %c0_3, %c0_4] : memref<1x32x128xbf16, #tpu.memory_space<vmem>>, vector<1x32x128xbf16>
    %3 = vector.shape_cast %2 : vector<1x32x128xbf16> to vector<32x128xbf16>
    %cst = arith.constant dense<0.000000e+00> : vector<16x128xf32>
    %4 = tpu.matmul %1, %3, %cst {dimension_numbers = #tpu.dot_dimension_numbers<[1], [0], [0], [1], [0, 0, 1, 1], [], []>} : vector<16x32xbf16>, vector<32x128xbf16>, vector<16x128xf32> -> vector<16x128xf32>
    %cst_5 = arith.constant 0.000000e+00 : f32
    %5 = vector.broadcast %cst_5 : f32 to vector<16x128xf32>
    %6 = arith.cmpf oge, %4, %5 : vector<16x128xf32>
    %cst_6 = arith.constant 2.000000e-01 : f32
    %7 = vector.broadcast %cst_6 : f32 to vector<16x128xf32>
    %8 = arith.mulf %7, %4 : vector<16x128xf32>
    %9 = arith.select %6, %4, %8 : vector<16x128xi1>, vector<16x128xf32>
    %10 = vector.shape_cast %9 : vector<16x128xf32> to vector<1x16x128xf32>
    %c0_7 = arith.constant 0 : index
    %c0_8 = arith.constant 0 : index
    %c0_9 = arith.constant 0 : index
    %11 = vector.load %arg4[%c0_7, %c0_8, %c0_9] : memref<1x16x128xf32, #tpu.memory_space<vmem>>, vector<1x16x128xf32>
    tpu.vector_store %arg4[%c0_7, %c0_8, %c0_9], %10 {strides = array<i32>} : memref<1x16x128xf32, #tpu.memory_space<vmem>>, vector<1x16x128xf32>,
    %cst_10 = arith.constant dense<0.000000e+00> : vector<16xf32>
    %12 = vector.multi_reduction <add>, %9, %cst_10 [1] : vector<16x128xf32> to vector<16xf32>
    %13 = vector.shape_cast %12 : vector<16xf32> to vector<16x1xf32>
    %14 = vector.shape_cast %13 : vector<16x1xf32> to vector<1x1x16x1xf32>
    %c0_11 = arith.constant 0 : index
    %c0_12 = arith.constant 0 : index
    %c0_13 = arith.constant 0 : index
    %c0_14 = arith.constant 0 : index
    %15 = vector.load %arg5[%c0_11, %c0_12, %c0_13, %c0_14] : memref<1x1x16x1xf32, #tpu.memory_space<vmem>>, vector<1x1x16x1xf32>
    tpu.vector_store %arg5[%c0_11, %c0_12, %c0_13, %c0_14], %14 {strides = array<i32>} : memref<1x1x16x1xf32, #tpu.memory_space<vmem>>, vector<1x1x16x1xf32>,
    %16 = arith.mulf %9, %9 : vector<16x128xf32>
    %cst_15 = arith.constant dense<0.000000e+00> : vector<16xf32>
    %17 = vector.multi_reduction <add>, %16, %cst_15 [1] : vector<16x128xf32> to vector<16xf32>
    %18 = vector.shape_cast %17 : vector<16xf32> to vector<16x1xf32>
    %19 = vector.shape_cast %18 : vector<16x1xf32> to vector<1x1x16x1xf32>
    %c0_16 = arith.constant 0 : index
    %c0_17 = arith.constant 0 : index
    %c0_18 = arith.constant 0 : index
    %c0_19 = arith.constant 0 : index
    %20 = vector.load %arg6[%c0_16, %c0_17, %c0_18, %c0_19] : memref<1x1x16x1xf32, #tpu.memory_space<vmem>>, vector<1x1x16x1xf32>
    tpu.vector_store %arg6[%c0_16, %c0_17, %c0_18, %c0_19], %19 {strides = array<i32>} : memref<1x1x16x1xf32, #tpu.memory_space<vmem>>, vector<1x1x16x1xf32>,
    return
  }
  func.func @transform_0(%arg0: i32, %arg1: i32) -> (i32, i32, i32) {
    %c0_i32 = arith.constant 0 : i32
    %c0_i32_0 = arith.constant 0 : i32
    %c0_i32_1 = arith.constant 0 : i32
    return %arg0, %c0_i32, %c0_i32_0 : i32, i32, i32
  }
  func.func @transform_1(%arg0: i32, %arg1: i32) -> (i32, i32, i32) {
    %c0_i32 = arith.constant 0 : i32
    %c0_i32_0 = arith.constant 0 : i32
    return %arg0, %c0_i32, %arg1 : i32, i32, i32
  }
  func.func @transform_2(%arg0: i32, %arg1: i32) -> (i32, i32, i32) {
    %c0_i32 = arith.constant 0 : i32
    %c0_i32_0 = arith.constant 0 : i32
    return %arg0, %c0_i32, %arg1 : i32, i32, i32
  }
  func.func @transform_3(%arg0: i32, %arg1: i32) -> (i32, i32, i32, i32) {
    %c0_i32 = arith.constant 0 : i32
    %c0_i32_0 = arith.constant 0 : i32
    %c0_i32_1 = arith.constant 0 : i32
    return %arg0, %arg1, %c0_i32, %c0_i32_0 : i32, i32, i32, i32
  }
  func.func @transform_4(%arg0: i32, %arg1: i32) -> (i32, i32, i32, i32) {
    %c0_i32 = arith.constant 0 : i32
    %c0_i32_0 = arith.constant 0 : i32
    %c0_i32_1 = arith.constant 0 : i32
    return %arg0, %arg1, %c0_i32, %c0_i32_0 : i32, i32, i32, i32
  }
}

</mosaic_0001>

<llo_original>
// kernel: _lambda_.6
$region0: #{_lambda_.6}
  #allocation0 [shape = 'u32[]', space=smem, size = 0x4, offset = 0x4, fixed_abs, tag = 'smem constant byte address 0x4 - core index']
  #allocation1 [shape = 'u32[144,128]{1,0:T(1,128)}', space=vmem, size = 0x12000, scoped, tag = 'internal scratch']
  %s0 = inlined_call_operand.vmem [shape: bf16[1,16,32], index: 0, kind: input, shape index: {}]
  %s1 = inlined_call_operand.vmem [shape: bf16[1,32,128], index: 1, kind: input, shape index: {}]
  %s2 = inlined_call_operand.vmem [shape: f32[1,16,128], index: 2, kind: output, shape index: {0}]
  %s3 = inlined_call_operand.vmem [shape: f32[1,1,16,1], index: 3, kind: output, shape index: {1}]
  %s4 = inlined_call_operand.vmem [shape: f32[1,1,16,1], index: 4, kind: output, shape index: {2}]
  %5 = xla_tuple %s2, %s3, %s4
  %s6 = sld [smem:[#allocation0]]
  $region34: #{_lambda_.6} parent=0
    _
  %s8 = ssub.s32 1, %s6
  %s9 = scalar_select 0, %s8, %s6
  // Predicated region
  $region2: #{_lambda_.6} parent=0 // pred_check
    _
  $region3: #{_lambda_.6} parent=0 // pred_check_branch
    %11 = sbr.rel (0) target = $region5
  $region4: #{_lambda_.6} parent=0 // pred_region
    _
  $region5: #{_lambda_.6} parent=0 // pred_fallthru
    _
  // Predicated region
  $region6: #{_lambda_.6} parent=0 // pred_check
    _
  $region7: #{_lambda_.6} parent=0 // pred_check_branch
    %13 = sbr.rel (0) target = $region9
  $region8: #{_lambda_.6} parent=0 // pred_region
    _
  $region9: #{_lambda_.6} parent=0 // pred_fallthru
    _
  %v15 = vld [vmem:[%s0] sm:$0xf]
  %v16 = vld [vmem:[%s0 + $0x4] sm:$0xf]
  %v17 = vld [vmem:[%s1] sm:$0xf]
  %v18 = vld [vmem:[%s1 + $0x4] sm:$0xf]
  %v19 = vld [vmem:[%s1 + $0x8] sm:$0xf]
  %v20 = vld [vmem:[%s1 + $0xc] sm:$0xf]
  %v23 = vunpack.c.l.b16 %v15
  %v24 = vunpack.c.l.b16 %v16
  %v25 = vpack.c.b16 %v24, %v23
  %v30 = vunpack.c.l.b16 %v17
  %v31 = vunpack.c.l.b16 %v18
  %v32 = vunpack.c.l.b16 %v19
  %v33 = vunpack.c.l.b16 %v20
  %v34 = vpack.c.b16 %v31, %v30
  %v35 = vpack.c.b16 %v33, %v32
  %vm38 = vcmask 261120
  %v40 = vsel %vm38, %v25, 0
  %42 = vmatprep.subr.bf16.mxu0 0
  %43 = vmatpush1.bf16.msra.mxu0 %v34
  %44 = vmatprep.subr.bf16.mxu0 0
  %45 = vmatpush1.bf16.msra.mxu0 %v35
  %46 = vmatprep.subr.bf16.mxu0 0
  %47 = vmatpush1.bf16.msra.mxu0 0
  %48 = vmatprep.subr.bf16.mxu0 0
  %49 = vmatpush1.bf16.msra.mxu0 0
  %50 = vmatprep.subr.bf16.mxu0 0
  %51 = vmatpush1.bf16.msra.mxu0 0
  %52 = vmatprep.subr.bf16.mxu0 0
  %53 = vmatpush1.bf16.msra.mxu0 0
  %54 = vmatprep.subr.bf16.mxu0 0
  %55 = vmatpush1.bf16.msra.mxu0 0
  %56 = vmatprep.subr.bf16.mxu0 0
  %57 = vmatpush1.bf16.msra.mxu0 0
  %58 = vmatprep.subr.bf16.mxu0 0
  %59 = vmatpush1.bf16.msra.mxu0 0
  %60 = vmatprep.subr.bf16.mxu0 0
  %61 = vmatpush1.bf16.msra.mxu0 0
  %62 = vmatprep.subr.bf16.mxu0 0
  %63 = vmatpush1.bf16.msra.mxu0 0
  %64 = vmatprep.subr.bf16.mxu0 0
  %65 = vmatpush1.bf16.msra.mxu0 0
  %66 = vmatprep.subr.bf16.mxu0 0
  %67 = vmatpush1.bf16.msra.mxu0 0
  %68 = vmatprep.subr.bf16.mxu0 0
  %69 = vmatpush1.bf16.msra.mxu0 0
  %70 = vmatprep.subr.bf16.mxu0 0
  %71 = vmatpush1.bf16.msra.mxu0 0
  %72 = vmatprep.subr.bf16.mxu0 0
  %73 = vmatpush1.bf16.msra.mxu0 0
  %74 = vmatprep.mubr.bf16.mxu0 0
  %75 = vmatmul.mubr.bf16.gmra.mrb[0].mxu0 %v40
  %v76 = vpop.f32.mrb[0].mxu0
  %v77 = vadd.f32 0.0, %v76
  %v78 = vpop.f32.mrb[0].mxu0
  %v79 = vpop.f32.mrb[0].mxu0
  %v80 = vadd.f32 0.0, %v79
  %v81 = vpop.f32.mrb[0].mxu0
  %82 = vdwg.mxu0
  %vm83 = vcmp.ge.f32.partialorder %v77, 0.0
  %vm84 = vcmp.ge.f32.partialorder %v80, 0.0
  %v85 = vmul.f32 %v77, 0.2
  %v86 = vmul.f32 %v80, 0.2
  %v87 = vsel %vm83, %v77, %v85
  %v88 = vsel %vm84, %v80, %v86
  %89 = vst [vmem:[%s2] sm:$0xff] %v87
  %90 = vst [vmem:[%s2 + $0x8] sm:$0xff] %v88
  %91 = vadd.xlane.f32.xlu0 %v87
  %v92 = vpop.xlane.xlu0 %91
  %93 = vadd.xlane.f32.xlu0 %v88
  %v94 = vpop.xlane.xlu0 %93
  %vm95 = vcmask 7168
  %96 = vst.msk [vmem:[%s3] sm:$0xff] %vm95, %v92
  %97 = vst.msk [vmem:[%s3 + $0x8] sm:$0xff] %vm95, %v94
  %v98 = vmul.f32 %v87, %v87
  %v99 = vmul.f32 %v88, %v88
  %100 = vadd.xlane.f32.xlu0 %v98
  %v101 = vpop.xlane.xlu0 %100
  %102 = vadd.xlane.f32.xlu0 %v99
  %v103 = vpop.xlane.xlu0 %102
  %104 = vst.msk [vmem:[%s4] sm:$0xff] %vm95, %v101
  %105 = vst.msk [vmem:[%s4 + $0x8] sm:$0xff] %vm95, %v103
  // Predicated region
  $region10: #{_lambda_.6} parent=0 // pred_check
    _
  $region11: #{_lambda_.6} parent=0 // pred_check_branch
    %107 = sbr.rel (0) target = $region13
  $region12: #{_lambda_.6} parent=0 // pred_region
    _
  $region13: #{_lambda_.6} parent=0 // pred_fallthru
    _
  // Predicated region
  $region14: #{_lambda_.6} parent=0 // pred_check
    _
  $region15: #{_lambda_.6} parent=0 // pred_check_branch
    %109 = sbr.rel (0) target = $region17
  $region16: #{_lambda_.6} parent=0 // pred_region
    _
  $region17: #{_lambda_.6} parent=0 // pred_fallthru
    _
  // Predicated region
  $region18: #{_lambda_.6} parent=0 // pred_check
    _
  $region19: #{_lambda_.6} parent=0 // pred_check_branch
    %111 = sbr.rel (0) target = $region21
  $region20: #{_lambda_.6} parent=0 // pred_region
    _
  $region21: #{_lambda_.6} parent=0 // pred_fallthru
    _
  // Predicated region
  $region22: #{_lambda_.6} parent=0 // pred_check
    _
  $region23: #{_lambda_.6} parent=0 // pred_check_branch
    %113 = sbr.rel (0) target = $region25
  $region24: #{_lambda_.6} parent=0 // pred_region
    _
  $region25: #{_lambda_.6} parent=0 // pred_fallthru
    _
  // Predicated region
  $region26: #{_lambda_.6} parent=0 // pred_check
    _
  $region27: #{_lambda_.6} parent=0 // pred_check_branch
    %115 = sbr.rel (0) target = $region29
  $region28: #{_lambda_.6} parent=0 // pred_region
    _
  $region29: #{_lambda_.6} parent=0 // pred_fallthru
    _
  // Predicated region
  $region30: #{_lambda_.6} parent=0 // pred_check
    _
  $region31: #{_lambda_.6} parent=0 // pred_check_branch
    %117 = sbr.rel (0) target = $region33
  $region32: #{_lambda_.6} parent=0 // pred_region
    _
  $region33: #{_lambda_.6} parent=0 // pred_fallthru
    _

// kernel: _lambda_.7
$region0: #{_lambda_.7}
  #allocation0 [shape = 'u32[]', space=smem, size = 0x4, offset = 0x4, fixed_abs, tag = 'smem constant byte address 0x4 - core index']
  #allocation1 [shape = 'u32[144,128]{1,0:T(1,128)}', space=vmem, size = 0x12000, scoped, tag = 'internal scratch']
  %s0 = inlined_call_operand.vmem [shape: f32[1,16,128], index: 0, kind: input, shape index: {}]
  %s1 = inlined_call_operand.vmem [shape: f32[1,16,1], index: 1, kind: input, shape index: {}]
  %s2 = inlined_call_operand.vmem [shape: f32[1,16,1], index: 2, kind: input, shape index: {}]
  %s3 = inlined_call_operand.vmem [shape: f32[1,16,128], index: 3, kind: output, shape index: {}]
  %s4 = sld [smem:[#allocation0]]
  $region22: #{_lambda_.7} parent=0
    _
  %s6 = ssub.s32 1, %s4
  %s7 = scalar_select 0, %s6, %s4
  // Predicated region
  $region2: #{_lambda_.7} parent=0 // pred_check
    _
  $region3: #{_lambda_.7} parent=0 // pred_check_branch
    %9 = sbr.rel (0) target = $region5
  $region4: #{_lambda_.7} parent=0 // pred_region
    _
  $region5: #{_lambda_.7} parent=0 // pred_fallthru
    _
  // Predicated region
  $region6: #{_lambda_.7} parent=0 // pred_check
    _
  $region7: #{_lambda_.7} parent=0 // pred_check_branch
    %11 = sbr.rel (0) target = $region9
  $region8: #{_lambda_.7} parent=0 // pred_region
    _
  $region9: #{_lambda_.7} parent=0 // pred_fallthru
    _
  // Predicated region
  $region10: #{_lambda_.7} parent=0 // pred_check
    _
  $region11: #{_lambda_.7} parent=0 // pred_check_branch
    %13 = sbr.rel (0) target = $region13
  $region12: #{_lambda_.7} parent=0 // pred_region
    _
  $region13: #{_lambda_.7} parent=0 // pred_fallthru
    _
  %v14 = vld [vmem:[%s0] sm:$0xff]
  %v15 = vld [vmem:[%s0 + $0x8] sm:$0xff]
  %v16 = vld [vmem:[%s1] sm:$0xff]
  %v17 = vld [vmem:[%s1 + $0x8] sm:$0xff]
  %19 = vset.pattern.permute.xlu0 0
  %20 = vperm.xlu0 %19, %v16
  %v21 = vpop.permute.xlu0 %20
  %24 = vset.pattern.permute.xlu0 0
  %25 = vperm.xlu0 %24, %v17
  %v26 = vpop.permute.xlu0 %25
  %v28 = vmul.f32 %v14, %v21
  %v29 = vmul.f32 %v15, %v26
  %v30 = vld [vmem:[%s2] sm:$0xff]
  %v31 = vld [vmem:[%s2 + $0x8] sm:$0xff]
  %33 = vset.pattern.permute.xlu0 0
  %34 = vperm.xlu0 %33, %v30
  %v35 = vpop.permute.xlu0 %34
  %38 = vset.pattern.permute.xlu0 0
  %39 = vperm.xlu0 %38, %v31
  %v40 = vpop.permute.xlu0 %39
  %v42 = vadd.f32 %v28, %v35
  %v43 = vadd.f32 %v29, %v40
  %44 = vst [vmem:[%s3] sm:$0xff] %v42
  %45 = vst [vmem:[%s3 + $0x8] sm:$0xff] %v43
  // Predicated region
  $region14: #{_lambda_.7} parent=0 // pred_check
    _
  $region15: #{_lambda_.7} parent=0 // pred_check_branch
    %47 = sbr.rel (0) target = $region17
  $region16: #{_lambda_.7} parent=0 // pred_region
    _
  $region17: #{_lambda_.7} parent=0 // pred_fallthru
    _
  // Predicated region
  $region18: #{_lambda_.7} parent=0 // pred_check
    _
  $region19: #{_lambda_.7} parent=0 // pred_check_branch
    %49 = sbr.rel (0) target = $region21
  $region20: #{_lambda_.7} parent=0 // pred_region
    _
  $region21: #{_lambda_.7} parent=0 // pred_fallthru
    _

// kernel: _lambda_.8
$region0: #{_lambda_.8}
  #allocation0 [shape = 'u32[]', space=smem, size = 0x4, offset = 0x4, fixed_abs, tag = 'smem constant byte address 0x4 - core index']
  #allocation1 [shape = 'u32[144,128]{1,0:T(1,128)}', space=vmem, size = 0x12000, scoped, tag = 'internal scratch']
  %s0 = inlined_call_operand.vmem [shape: bf16[4,16,64], index: 0, kind: input, shape index: {}]
  %s1 = inlined_call_operand.vmem [shape: bf16[4,64,128], index: 1, kind: input, shape index: {}]
  %s2 = inlined_call_operand.vmem [shape: f32[4,16,128], index: 2, kind: output, shape index: {0}]
  %s3 = inlined_call_operand.vmem [shape: f32[4,1,16,1], index: 3, kind: output, shape index: {1}]
  %s4 = inlined_call_operand.vmem [shape: f32[4,1,16,1], index: 4, kind: output, shape index: {2}]
  %5 = xla_tuple %s2, %s3, %s4
  %s6 = sld [smem:[#allocation0]]
  $region57: #{_lambda_.8} parent=0
    _
  %s8 = ssub.s32 1, %s6
  %s9 = scalar_select 0, %s8, %s6
  loop: start=0, step=1, limit=6
  $region2: #{_lambda_.8} parent=0 // loop_pre_header
    _
  $region3: #{_lambda_.8} parent=0 // loop_header
    %s11 = sphi 0, %s15
    %p12 = scmp.ge.s32.totalorder %s11, 6
    %s18 = sphi 0, %s30
    %s19 = sphi 0, %s26
    %s20 = sphi 0, %s18
    %s21 = sphi 0, %s19
    %s22 = sphi 0, %s20
    %s23 = sphi 0, %s21
    %s33 = sphi 0, %s35
    %s36 = sphi 0, %s33
    %s37 = sphi 0, %s36
    %s53 = sphi 0, %s37
    %s61 = sphi 0, %s63
    %s64 = sphi 0, %s61
    %s65 = sphi 0, %s64
    %s81 = sphi 0, %s65
    %s89 = sphi 0, %s91
    %s92 = sphi 0, %s89
    %s93 = sphi 0, %s92
    %s109 = sphi 0, %s93
    %s117 = sphi 0, %s119
    %s120 = sphi 0, %s117
    %s121 = sphi 0, %s120
    %s137 = sphi 0, %s121
    %s145 = sphi 0, %s147
    %s148 = sphi 0, %s145
    %s149 = sphi 0, %s148
    %s165 = sphi 0, %s149
  $region4: #{_lambda_.8} parent=0 // loop_header_branch
    %14 = sbr.rel (%p12) target = $region8
  $region5: #{_lambda_.8} parent=0 // loop_body
    %s16 = ssub.s32 %s11, 1
    %s17 = ssub.s32 %s11, 2
    %s24 = sadd.s32 1, %s19
    %p25 = scmp.ge.s32.totalorder %s24, 1
    %s26 = scalar_select %p25, 0, %s24
    %s27 = sadd.s32 1, %s18
    %s28 = scalar_select %p25, %s27, %s18
    %p29 = scmp.ge.s32.totalorder %s28, 4
    %s30 = scalar_select %p29, 0, %s28
    %s31 = ssub.s32 %s18, %s30
    %p32 = scmp.eq.s32.totalorder %s31, 0
    %s34 = sadd.s32 %s33, 1
    %s35 = scalar_select %p32, %s33, %s34
    %p38 = pneg %p32
    %p39 = scmp.eq.s32.totalorder %s11, 3
    %p40 = por %p38, %p39
    %p41 = scmp.ne.s32.totalorder %s33, %s36
    %p42 = scmp.eq.s32.totalorder %s11, 0
    %p43 = por %p41, %p42
    %p44 = scmp.ne.s32.totalorder %s33, %s36
    %p45 = scmp.eq.s32.totalorder %s16, 3
    %p46 = por %p44, %p45
    %p47 = scmp.ne.s32.totalorder %s36, %s37
    %p48 = scmp.eq.s32.totalorder %s16, 0
    %p49 = por %p47, %p48
    %p50 = scmp.ne.s32.totalorder %s36, %s37
    %p51 = scmp.eq.s32.totalorder %s17, 3
    %p52 = por %p50, %p51
    %p54 = scmp.ne.s32.totalorder %s37, %s53
    %p55 = scmp.eq.s32.totalorder %s17, 0
    %p56 = por %p54, %p55
    %s57 = ssub.s32 %s18, %s30
    %s58 = ssub.s32 %s19, %s26
    %s59 = sor.u32 %s57, %s58
    %p60 = scmp.eq.s32.totalorder %s59, 0
    %s62 = sadd.s32 %s61, 1
    %s63 = scalar_select %p60, %s61, %s62
    %p66 = pneg %p60
    %p67 = scmp.eq.s32.totalorder %s11, 3
    %p68 = por %p66, %p67
    %p69 = scmp.ne.s32.totalorder %s61, %s64
    %p70 = scmp.eq.s32.totalorder %s11, 0
    %p71 = por %p69, %p70
    %p72 = scmp.ne.s32.totalorder %s61, %s64
    %p73 = scmp.eq.s32.totalorder %s16, 3
    %p74 = por %p72, %p73
    %p75 = scmp.ne.s32.totalorder %s64, %s65
    %p76 = scmp.eq.s32.totalorder %s16, 0
    %p77 = por %p75, %p76
    %p78 = scmp.ne.s32.totalorder %s64, %s65
    %p79 = scmp.eq.s32.totalorder %s17, 3
    %p80 = por %p78, %p79
    %p82 = scmp.ne.s32.totalorder %s65, %s81
    %p83 = scmp.eq.s32.totalorder %s17, 0
    %p84 = por %p82, %p83
    %s85 = ssub.s32 %s18, %s30
    %s86 = ssub.s32 %s19, %s26
    %s87 = sor.u32 %s85, %s86
    %p88 = scmp.eq.s32.totalorder %s87, 0
    %s90 = sadd.s32 %s89, 1
    %s91 = scalar_select %p88, %s89, %s90
    %p94 = pneg %p88
    %p95 = scmp.eq.s32.totalorder %s11, 3
    %p96 = por %p94, %p95
    %p97 = scmp.ne.s32.totalorder %s89, %s92
    %p98 = scmp.eq.s32.totalorder %s11, 0
    %p99 = por %p97, %p98
    %p100 = scmp.ne.s32.totalorder %s89, %s92
    %p101 = scmp.eq.s32.totalorder %s16, 3
    %p102 = por %p100, %p101
    %p103 = scmp.ne.s32.totalorder %s92, %s93
    %p104 = scmp.eq.s32.totalorder %s16, 0
    %p105 = por %p103, %p104
    %p106 = scmp.ne.s32.totalorder %s92, %s93
    %p107 = scmp.eq.s32.totalorder %s17, 3
    %p108 = por %p106, %p107
    %p110 = scmp.ne.s32.totalorder %s93, %s109
    %p111 = scmp.eq.s32.totalorder %s17, 0
    %p112 = por %p110, %p111
    %s113 = ssub.s32 %s18, %s30
    %s114 = ssub.s32 %s19, %s26
    %s115 = sor.u32 %s113, %s114
    %p116 = scmp.eq.s32.totalorder %s115, 0
    %s118 = sadd.s32 %s117, 1
    %s119 = scalar_select %p116, %s117, %s118
    %p122 = pneg %p116
    %p123 = scmp.eq.s32.totalorder %s11, 3
    %p124 = por %p122, %p123
    %p125 = scmp.ne.s32.totalorder %s117, %s120
    %p126 = scmp.eq.s32.totalorder %s11, 0
    %p127 = por %p125, %p126
    %p128 = scmp.ne.s32.totalorder %s117, %s120
    %p129 = scmp.eq.s32.totalorder %s16, 3
    %p130 = por %p128, %p129
    %p131 = scmp.ne.s32.totalorder %s120, %s121
    %p132 = scmp.eq.s32.totalorder %s16, 0
    %p133 = por %p131, %p132
    %p134 = scmp.ne.s32.totalorder %s120, %s121
    %p135 = scmp.eq.s32.totalorder %s17, 3
    %p136 = por %p134, %p135
    %p138 = scmp.ne.s32.totalorder %s121, %s137
    %p139 = scmp.eq.s32.totalorder %s17, 0
    %p140 = por %p138, %p139
    %s141 = ssub.s32 %s18, %s30
    %s142 = ssub.s32 %s19, %s26
    %s143 = sor.u32 %s141, %s142
    %p144 = scmp.eq.s32.totalorder %s143, 0
    %s146 = sadd.s32 %s145, 1
    %s147 = scalar_select %p144, %s145, %s146
    %p150 = pneg %p144
    %p151 = scmp.eq.s32.totalorder %s11, 3
    %p152 = por %p150, %p151
    %p153 = scmp.ne.s32.totalorder %s145, %s148
    %p154 = scmp.eq.s32.totalorder %s11, 0
    %p155 = por %p153, %p154
    %p156 = scmp.ne.s32.totalorder %s145, %s148
    %p157 = scmp.eq.s32.totalorder %s16, 3
    %p158 = por %p156, %p157
    %p159 = scmp.ne.s32.totalorder %s148, %s149
    %p160 = scmp.eq.s32.totalorder %s16, 0
    %p161 = por %p159, %p160
    %p162 = scmp.ne.s32.totalorder %s148, %s149
    %p163 = scmp.eq.s32.totalorder %s17, 3
    %p164 = por %p162, %p163
    %p166 = scmp.ne.s32.totalorder %s149, %s165
    %p167 = scmp.eq.s32.totalorder %s17, 0
    %p168 = por %p166, %p167
    %p169 = scmp.le.s32.totalorder 1, %s11
    %p170 = scmp.lt.s32.totalorder %s11, 5
    %p171 = pnand %p169, %p170
    %p172 = pneg %p171
    // Predicated region
    $region9: #{_lambda_.8} parent=5 // pred_check
      _
    $region10: #{_lambda_.8} parent=5 // pred_check_branch
      %174 = sbr.rel (%p171) target = $region12
    $region11: #{_lambda_.8} parent=5 // pred_region
      %s175 = ssub.s32 %s11, 1
    $region12: #{_lambda_.8} parent=5 // pred_fallthru
      _
    %p176 = scmp.lt.s32.totalorder %s11, 4
    // Predicated region
    $region13: #{_lambda_.8} parent=5 // pred_check
      %p177 = pneg %p176
    $region14: #{_lambda_.8} parent=5 // pred_check_branch
      %179 = sbr.rel (%p177) target = $region16
    $region15: #{_lambda_.8} parent=5 // pred_region
      // Predicated region
      $region17: #{_lambda_.8} parent=15 // pred_check
        %p180 = pneg %p43
      $region18: #{_lambda_.8} parent=15 // pred_check_branch
        %182 = sbr.rel (%p180) target = $region20
      $region19: #{_lambda_.8} parent=15 // pred_region
        %p183 = scmp.lt.s32.totalorder %s18, 3
        %s184 = scalar_select %p183, %s18, 3
        %s185 = smul.addr %s184, 2
        %s186 = smul.addr %s185, 4
        %s187 = scalar_lea.vmem %s0, %s186
      $region20: #{_lambda_.8} parent=15 // pred_fallthru
        _
      // Predicated region
      $region21: #{_lambda_.8} parent=15 // pred_check
        %p188 = pneg %p71
      $region22: #{_lambda_.8} parent=15 // pred_check_branch
        %190 = sbr.rel (%p188) target = $region24
      $region23: #{_lambda_.8} parent=15 // pred_region
        %p191 = scmp.lt.s32.totalorder %s18, 3
        %s192 = scalar_select %p191, %s18, 3
        %p193 = scmp.lt.s32.totalorder %s19, 0
        %s194 = scalar_select %p193, %s19, 0
        %s195 = smul.addr %s192, 8
        %s196 = sadd.s32 %s194, %s195
        %s197 = smul.addr %s196, 4
        %s198 = scalar_lea.vmem %s1, %s197
      $region24: #{_lambda_.8} parent=15 // pred_fallthru
        _
    $region16: #{_lambda_.8} parent=5 // pred_fallthru
      _
    %p199 = scmp.le.s32.totalorder 1, %s11
    %p200 = scmp.lt.s32.totalorder %s11, 5
    %p201 = pnand %p199, %p200
    %p202 = pneg %p201
    // Predicated region
    $region25: #{_lambda_.8} parent=5 // pred_check
      _
    $region26: #{_lambda_.8} parent=5 // pred_check_branch
      %204 = sbr.rel (%p201) target = $region28
    $region27: #{_lambda_.8} parent=5 // pred_region
      %s205 = ssub.s32 %s11, 1
      %p206 = scmp.lt.s32.totalorder %s20, 3
      %s207 = scalar_select %p206, %s20, 3
      %s208 = smul.addr %s207, 2
      %s209 = smul.addr %s208, 4
      %s210 = scalar_lea.vmem %s0, %s209
      %p211 = pneg %p49
      %p212 = pneg %p46
      %p213 = scmp.lt.s32.totalorder %s20, 3
      %s214 = scalar_select %p213, %s20, 3
      %p215 = scmp.lt.s32.totalorder %s21, 0
      %s216 = scalar_select %p215, %s21, 0
      %s217 = smul.addr %s214, 8
      %s218 = sadd.s32 %s216, %s217
      %s219 = smul.addr %s218, 4
      %s220 = scalar_lea.vmem %s1, %s219
      %p221 = pneg %p77
      %p222 = pneg %p74
      %p223 = pneg %p105
      %p224 = pneg %p102
      %p225 = scmp.lt.s32.totalorder %s20, 3
      %s226 = scalar_select %p225, %s20, 3
      %p227 = scmp.lt.s32.totalorder %s21, 0
      %s228 = scalar_select %p227, %s21, 0
      %s229 = smul.addr %s226, 2
      %s230 = sadd.s32 %s228, %s229
      %s231 = smul.addr %s230, 8
      %s232 = scalar_lea.vmem %s2, %s231
      %p233 = pneg %p133
      %p234 = pneg %p130
      %p235 = scmp.lt.s32.totalorder %s20, 3
      %s236 = scalar_select %p235, %s20, 3
      %p237 = scmp.lt.s32.totalorder %s21, 0
      %s238 = scalar_select %p237, %s21, 0
      %s239 = smul.addr %s238, 2
      %s240 = smul.addr %s236, 2
      %s241 = sadd.s32 %s239, %s240
      %s242 = smul.addr %s241, 8
      %s243 = scalar_lea.vmem %s3, %s242
      %p244 = pneg %p161
      %p245 = pneg %p158
      %p246 = scmp.lt.s32.totalorder %s20, 3
      %s247 = scalar_select %p246, %s20, 3
      %p248 = scmp.lt.s32.totalorder %s21, 0
      %s249 = scalar_select %p248, %s21, 0
      %s250 = smul.addr %s249, 2
      %s251 = smul.addr %s247, 2
      %s252 = sadd.s32 %s250, %s251
      %s253 = smul.addr %s252, 8
      %s254 = scalar_lea.vmem %s4, %s253
      %p255 = scmp.lt.s32.totalorder %s20, 3
      %s256 = scalar_select %p255, %s20, 3
      %s257 = smul.addr %s256, 2
      %s258 = smul.addr %s257, 4
      %s259 = scalar_lea.vmem %s0, %s258
      %p260 = scmp.lt.s32.totalorder %s20, 3
      %s261 = scalar_select %p260, %s20, 3
      %p262 = scmp.lt.s32.totalorder %s21, 0
      %s263 = scalar_select %p262, %s21, 0
      %s264 = smul.addr %s261, 8
      %s265 = sadd.s32 %s263, %s264
      %s266 = smul.addr %s265, 4
      %s267 = scalar_lea.vmem %s1, %s266
      %p268 = scmp.lt.s32.totalorder %s20, 3
      %s269 = scalar_select %p268, %s20, 3
      %p270 = scmp.lt.s32.totalorder %s21, 0
      %s271 = scalar_select %p270, %s21, 0
      %s272 = smul.addr %s269, 2
      %s273 = sadd.s32 %s271, %s272
      %s274 = smul.addr %s273, 8
      %s275 = scalar_lea.vmem %s2, %s274
      %p276 = scmp.lt.s32.totalorder %s20, 3
      %s277 = scalar_select %p276, %s20, 3
      %p278 = scmp.lt.s32.totalorder %s21, 0
      %s279 = scalar_select %p278, %s21, 0
      %s280 = smul.addr %s279, 2
      %s281 = smul.addr %s277, 2
      %s282 = sadd.s32 %s280, %s281
      %s283 = smul.addr %s282, 8
      %s284 = scalar_lea.vmem %s3, %s283
      %p285 = scmp.lt.s32.totalorder %s20, 3
      %s286 = scalar_select %p285, %s20, 3
      %p287 = scmp.lt.s32.totalorder %s21, 0
      %s288 = scalar_select %p287, %s21, 0
      %s289 = smul.addr %s288, 2
      %s290 = smul.addr %s286, 2
      %s291 = sadd.s32 %s289, %s290
      %s292 = smul.addr %s291, 8
      %s293 = scalar_lea.vmem %s4, %s292
      %v295 = vld [vmem:[%s259] sm:$0xf]
      %v296 = vld [vmem:[%s259 + $0x4] sm:$0xf]
      %v297 = vld [vmem:[%s267] sm:$0xf]
      %v298 = vld [vmem:[%s267 + $0x4] sm:$0xf]
      %v299 = vld [vmem:[%s267 + $0x8] sm:$0xf]
      %v300 = vld [vmem:[%s267 + $0xc] sm:$0xf]
      %v301 = vld [vmem:[%s267 + $0x10] sm:$0xf]
      %v302 = vld [vmem:[%s267 + $0x14] sm:$0xf]
      %v303 = vld [vmem:[%s267 + $0x18] sm:$0xf]
      %v304 = vld [vmem:[%s267 + $0x1c] sm:$0xf]
      %v307 = vunpack.c.l.b16 %v295
      %v308 = vunpack.c.l.b16 %v296
      %v309 = vpack.c.b16 %v308, %v307
      %v318 = vunpack.c.l.b16 %v297
      %v319 = vunpack.c.l.b16 %v298
      %v320 = vunpack.c.l.b16 %v299
      %v321 = vunpack.c.l.b16 %v300
      %v322 = vunpack.c.l.b16 %v301
      %v323 = vunpack.c.l.b16 %v302
      %v324 = vunpack.c.l.b16 %v303
      %v325 = vunpack.c.l.b16 %v304
      %v326 = vpack.c.b16 %v319, %v318
      %v327 = vpack.c.b16 %v321, %v320
      %v328 = vpack.c.b16 %v323, %v322
      %v329 = vpack.c.b16 %v325, %v324
      %vm334 = vcmask 523264
      %v336 = vsel %vm334, %v309, 0
      %338 = vmatprep.subr.bf16.mxu0 0
      %339 = vmatpush1.bf16.msra.mxu0 %v326
      %340 = vmatprep.subr.bf16.mxu0 0
      %341 = vmatpush1.bf16.msra.mxu0 %v327
      %342 = vmatprep.subr.bf16.mxu0 0
      %343 = vmatpush1.bf16.msra.mxu0 %v328
      %344 = vmatprep.subr.bf16.mxu0 0
      %345 = vmatpush1.bf16.msra.mxu0 %v329
      %346 = vmatprep.subr.bf16.mxu0 0
      %347 = vmatpush1.bf16.msra.mxu0 0
      %348 = vmatprep.subr.bf16.mxu0 0
      %349 = vmatpush1.bf16.msra.mxu0 0
      %350 = vmatprep.subr.bf16.mxu0 0
      %351 = vmatpush1.bf16.msra.mxu0 0
      %352 = vmatprep.subr.bf16.mxu0 0
      %353 = vmatpush1.bf16.msra.mxu0 0
      %354 = vmatprep.subr.bf16.mxu0 0
      %355 = vmatpush1.bf16.msra.mxu0 0
      %356 = vmatprep.subr.bf16.mxu0 0
      %357 = vmatpush1.bf16.msra.mxu0 0
      %358 = vmatprep.subr.bf16.mxu0 0
      %359 = vmatpush1.bf16.msra.mxu0 0
      %360 = vmatprep.subr.bf16.mxu0 0
      %361 = vmatpush1.bf16.msra.mxu0 0
      %362 = vmatprep.subr.bf16.mxu0 0
      %363 = vmatpush1.bf16.msra.mxu0 0
      %364 = vmatprep.subr.bf16.mxu0 0
      %365 = vmatpush1.bf16.msra.mxu0 0
      %366 = vmatprep.subr.bf16.mxu0 0
      %367 = vmatpush1.bf16.msra.mxu0 0
      %368 = vmatprep.subr.bf16.mxu0 0
      %369 = vmatpush1.bf16.msra.mxu0 0
      %370 = vmatprep.mubr.bf16.mxu0 0
      %371 = vmatmul.mubr.bf16.gmra.mrb[0].mxu0 %v336
      %v372 = vpop.f32.mrb[0].mxu0
      %v373 = vadd.f32 0.0, %v372
      %v374 = vpop.f32.mrb[0].mxu0
      %v375 = vpop.f32.mrb[0].mxu0
      %v376 = vadd.f32 0.0, %v375
      %v377 = vpop.f32.mrb[0].mxu0
      %378 = vdwg.mxu0
      %vm379 = vcmp.ge.f32.partialorder %v373, 0.0
      %vm380 = vcmp.ge.f32.partialorder %v376, 0.0
      %v381 = vmul.f32 %v373, 0.2
      %v382 = vmul.f32 %v376, 0.2
      %v383 = vsel %vm379, %v373, %v381
      %v384 = vsel %vm380, %v376, %v382
      %385 = vst [vmem:[%s275] sm:$0xff] %v383
      %386 = vst [vmem:[%s275 + $0x8] sm:$0xff] %v384
      %387 = vadd.xlane.f32.xlu0 %v383
      %v388 = vpop.xlane.xlu0 %387
      %389 = vadd.xlane.f32.xlu0 %v384
      %v390 = vpop.xlane.xlu0 %389
      %vm391 = vcmask 7168
      %392 = vst.msk [vmem:[%s284] sm:$0xff] %vm391, %v388
      %393 = vst.msk [vmem:[%s284 + $0x8] sm:$0xff] %vm391, %v390
      %v394 = vmul.f32 %v383, %v383
      %v395 = vmul.f32 %v384, %v384
      %396 = vadd.xlane.f32.xlu0 %v394
      %v397 = vpop.xlane.xlu0 %396
      %398 = vadd.xlane.f32.xlu0 %v395
      %v399 = vpop.xlane.xlu0 %398
      %400 = vst.msk [vmem:[%s293] sm:$0xff] %vm391, %v397
      %401 = vst.msk [vmem:[%s293 + $0x8] sm:$0xff] %vm391, %v399
      %p402 = scmp.lt.s32.totalorder %s20, 3
      %s403 = scalar_select %p402, %s20, 3
      %p404 = scmp.lt.s32.totalorder %s21, 0
      %s405 = scalar_select %p404, %s21, 0
      %s406 = smul.addr %s403, 2
      %s407 = sadd.s32 %s405, %s406
      %s408 = smul.addr %s407, 8
      %s409 = scalar_lea.vmem %s2, %s408
      %p410 = scmp.lt.s32.totalorder %s20, 3
      %s411 = scalar_select %p410, %s20, 3
      %p412 = scmp.lt.s32.totalorder %s21, 0
      %s413 = scalar_select %p412, %s21, 0
      %s414 = smul.addr %s413, 2
      %s415 = smul.addr %s411, 2
      %s416 = sadd.s32 %s414, %s415
      %s417 = smul.addr %s416, 8
      %s418 = scalar_lea.vmem %s3, %s417
      %p419 = scmp.lt.s32.totalorder %s20, 3
      %s420 = scalar_select %p419, %s20, 3
      %p421 = scmp.lt.s32.totalorder %s21, 0
      %s422 = scalar_select %p421, %s21, 0
      %s423 = smul.addr %s422, 2
      %s424 = smul.addr %s420, 2
      %s425 = sadd.s32 %s423, %s424
      %s426 = smul.addr %s425, 8
      %s427 = scalar_lea.vmem %s4, %s426
      // Predicated region
      $region29: #{_lambda_.8} parent=27 // pred_check
        %p428 = pneg %p102
      $region30: #{_lambda_.8} parent=27 // pred_check_branch
        %430 = sbr.rel (%p428) target = $region32
      $region31: #{_lambda_.8} parent=27 // pred_region
        _
      $region32: #{_lambda_.8} parent=27 // pred_fallthru
        _
      // Predicated region
      $region33: #{_lambda_.8} parent=27 // pred_check
        %p431 = pneg %p130
      $region34: #{_lambda_.8} parent=27 // pred_check_branch
        %433 = sbr.rel (%p431) target = $region36
      $region35: #{_lambda_.8} parent=27 // pred_region
        _
      $region36: #{_lambda_.8} parent=27 // pred_fallthru
        _
      // Predicated region
      $region37: #{_lambda_.8} parent=27 // pred_check
        %p434 = pneg %p158
      $region38: #{_lambda_.8} parent=27 // pred_check_branch
        %436 = sbr.rel (%p434) target = $region40
      $region39: #{_lambda_.8} parent=27 // pred_region
        _
      $region40: #{_lambda_.8} parent=27 // pred_fallthru
        _
    $region28: #{_lambda_.8} parent=5 // pred_fallthru
      _
    %p437 = scmp.le.s32.totalorder 2, %s11
    // Predicated region
    $region41: #{_lambda_.8} parent=5 // pred_check
      %p438 = pneg %p437
    $region42: #{_lambda_.8} parent=5 // pred_check_branch
      %440 = sbr.rel (%p438) target = $region44
    $region43: #{_lambda_.8} parent=5 // pred_region
      %s441 = ssub.s32 %s11, 2
      // Predicated region
      $region45: #{_lambda_.8} parent=43 // pred_check
        %p442 = pneg %p108
      $region46: #{_lambda_.8} parent=43 // pred_check_branch
        %444 = sbr.rel (%p442) target = $region48
      $region47: #{_lambda_.8} parent=43 // pred_region
        %p445 = scmp.lt.s32.totalorder %s22, 3
        %s446 = scalar_select %p445, %s22, 3
        %p447 = scmp.lt.s32.totalorder %s23, 0
        %s448 = scalar_select %p447, %s23, 0
        %s449 = smul.addr %s446, 2
        %s450 = sadd.s32 %s448, %s449
        %s451 = smul.addr %s450, 8
        %s452 = scalar_lea.vmem %s2, %s451
      $region48: #{_lambda_.8} parent=43 // pred_fallthru
        _
      // Predicated region
      $region49: #{_lambda_.8} parent=43 // pred_check
        %p453 = pneg %p136
      $region50: #{_lambda_.8} parent=43 // pred_check_branch
        %455 = sbr.rel (%p453) target = $region52
      $region51: #{_lambda_.8} parent=43 // pred_region
        %p456 = scmp.lt.s32.totalorder %s22, 3
        %s457 = scalar_select %p456, %s22, 3
        %p458 = scmp.lt.s32.totalorder %s23, 0
        %s459 = scalar_select %p458, %s23, 0
        %s460 = smul.addr %s459, 2
        %s461 = smul.addr %s457, 2
        %s462 = sadd.s32 %s460, %s461
        %s463 = smul.addr %s462, 8
        %s464 = scalar_lea.vmem %s3, %s463
      $region52: #{_lambda_.8} parent=43 // pred_fallthru
        _
      // Predicated region
      $region53: #{_lambda_.8} parent=43 // pred_check
        %p465 = pneg %p164
      $region54: #{_lambda_.8} parent=43 // pred_check_branch
        %467 = sbr.rel (%p465) target = $region56
      $region55: #{_lambda_.8} parent=43 // pred_region
        %p468 = scmp.lt.s32.totalorder %s22, 3
        %s469 = scalar_select %p468, %s22, 3
        %p470 = scmp.lt.s32.totalorder %s23, 0
        %s471 = scalar_select %p470, %s23, 0
        %s472 = smul.addr %s471, 2
        %s473 = smul.addr %s469, 2
        %s474 = sadd.s32 %s472, %s473
        %s475 = smul.addr %s474, 8
        %s476 = scalar_lea.vmem %s4, %s475
      $region56: #{_lambda_.8} parent=43 // pred_fallthru
        _
    $region44: #{_lambda_.8} parent=5 // pred_fallthru
      _
  $region6: #{_lambda_.8} parent=0 // loop_footer
    %s15 = sadd.s32 1, %s11
  $region7: #{_lambda_.8} parent=0 // loop_footer_branch
    %10 = sbr.rel target = $region3
  $region8: #{_lambda_.8} parent=0 // loop_exit
    _

// kernel: _lambda_.9
$region0: #{_lambda_.9}
  #allocation0 [shape = 'u32[]', space=smem, size = 0x4, offset = 0x4, fixed_abs, tag = 'smem constant byte address 0x4 - core index']
  #allocation1 [shape = 'u32[144,128]{1,0:T(1,128)}', space=vmem, size = 0x12000, scoped, tag = 'internal scratch']
  %s0 = inlined_call_operand.vmem [shape: f32[4,16,128], index: 0, kind: input, shape index: {}]
  %s1 = inlined_call_operand.vmem [shape: f32[1,16,1], index: 1, kind: input, shape index: {}]
  %s2 = inlined_call_operand.vmem [shape: f32[1,16,1], index: 2, kind: input, shape index: {}]
  %s3 = inlined_call_operand.vmem [shape: f32[4,16,128], index: 3, kind: output, shape index: {}]
  %s4 = sld [smem:[#allocation0]]
  $region45: #{_lambda_.9} parent=0
    _
  %s6 = ssub.s32 1, %s4
  %s7 = scalar_select 0, %s6, %s4
  loop: start=0, step=1, limit=6
  $region2: #{_lambda_.9} parent=0 // loop_pre_header
    _
  $region3: #{_lambda_.9} parent=0 // loop_header
    %s9 = sphi 0, %s13
    %p10 = scmp.ge.s32.totalorder %s9, 6
    %s16 = sphi 0, %s28
    %s17 = sphi 0, %s24
    %s18 = sphi 0, %s16
    %s19 = sphi 0, %s17
    %s20 = sphi 0, %s18
    %s21 = sphi 0, %s19
    %s33 = sphi 0, %s35
    %s36 = sphi 0, %s33
    %s37 = sphi 0, %s36
    %s53 = sphi 0, %s37
    %s57 = sphi 0, %s57
    %s59 = sphi 0, %s57
    %s60 = sphi 0, %s59
    %s74 = sphi 0, %s60
    %s78 = sphi 0, %s78
    %s80 = sphi 0, %s78
    %s81 = sphi 0, %s80
    %s95 = sphi 0, %s81
    %s103 = sphi 0, %s105
    %s106 = sphi 0, %s103
    %s107 = sphi 0, %s106
    %s123 = sphi 0, %s107
  $region4: #{_lambda_.9} parent=0 // loop_header_branch
    %12 = sbr.rel (%p10) target = $region8
  $region5: #{_lambda_.9} parent=0 // loop_body
    %s14 = ssub.s32 %s9, 1
    %s15 = ssub.s32 %s9, 2
    %s22 = sadd.s32 1, %s17
    %p23 = scmp.ge.s32.totalorder %s22, 1
    %s24 = scalar_select %p23, 0, %s22
    %s25 = sadd.s32 1, %s16
    %s26 = scalar_select %p23, %s25, %s16
    %p27 = scmp.ge.s32.totalorder %s26, 4
    %s28 = scalar_select %p27, 0, %s26
    %s29 = ssub.s32 %s16, %s28
    %s30 = ssub.s32 %s17, %s24
    %s31 = sor.u32 %s29, %s30
    %p32 = scmp.eq.s32.totalorder %s31, 0
    %s34 = sadd.s32 %s33, 1
    %s35 = scalar_select %p32, %s33, %s34
    %p38 = pneg %p32
    %p39 = scmp.eq.s32.totalorder %s9, 3
    %p40 = por %p38, %p39
    %p41 = scmp.ne.s32.totalorder %s33, %s36
    %p42 = scmp.eq.s32.totalorder %s9, 0
    %p43 = por %p41, %p42
    %p44 = scmp.ne.s32.totalorder %s33, %s36
    %p45 = scmp.eq.s32.totalorder %s14, 3
    %p46 = por %p44, %p45
    %p47 = scmp.ne.s32.totalorder %s36, %s37
    %p48 = scmp.eq.s32.totalorder %s14, 0
    %p49 = por %p47, %p48
    %p50 = scmp.ne.s32.totalorder %s36, %s37
    %p51 = scmp.eq.s32.totalorder %s15, 3
    %p52 = por %p50, %p51
    %p54 = scmp.ne.s32.totalorder %s37, %s53
    %p55 = scmp.eq.s32.totalorder %s15, 0
    %p56 = por %p54, %p55
    %s58 = sadd.s32 %s57, 1
    %p61 = scmp.eq.s32.totalorder %s9, 3
    %p62 = scmp.ne.s32.totalorder %s57, %s59
    %p63 = scmp.eq.s32.totalorder %s9, 0
    %p64 = por %p62, %p63
    %p65 = scmp.ne.s32.totalorder %s57, %s59
    %p66 = scmp.eq.s32.totalorder %s14, 3
    %p67 = por %p65, %p66
    %p68 = scmp.ne.s32.totalorder %s59, %s60
    %p69 = scmp.eq.s32.totalorder %s14, 0
    %p70 = por %p68, %p69
    %p71 = scmp.ne.s32.totalorder %s59, %s60
    %p72 = scmp.eq.s32.totalorder %s15, 3
    %p73 = por %p71, %p72
    %p75 = scmp.ne.s32.totalorder %s60, %s74
    %p76 = scmp.eq.s32.totalorder %s15, 0
    %p77 = por %p75, %p76
    %s79 = sadd.s32 %s78, 1
    %p82 = scmp.eq.s32.totalorder %s9, 3
    %p83 = scmp.ne.s32.totalorder %s78, %s80
    %p84 = scmp.eq.s32.totalorder %s9, 0
    %p85 = por %p83, %p84
    %p86 = scmp.ne.s32.totalorder %s78, %s80
    %p87 = scmp.eq.s32.totalorder %s14, 3
    %p88 = por %p86, %p87
    %p89 = scmp.ne.s32.totalorder %s80, %s81
    %p90 = scmp.eq.s32.totalorder %s14, 0
    %p91 = por %p89, %p90
    %p92 = scmp.ne.s32.totalorder %s80, %s81
    %p93 = scmp.eq.s32.totalorder %s15, 3
    %p94 = por %p92, %p93
    %p96 = scmp.ne.s32.totalorder %s81, %s95
    %p97 = scmp.eq.s32.totalorder %s15, 0
    %p98 = por %p96, %p97
    %s99 = ssub.s32 %s16, %s28
    %s100 = ssub.s32 %s17, %s24
    %s101 = sor.u32 %s99, %s100
    %p102 = scmp.eq.s32.totalorder %s101, 0
    %s104 = sadd.s32 %s103, 1
    %s105 = scalar_select %p102, %s103, %s104
    %p108 = pneg %p102
    %p109 = scmp.eq.s32.totalorder %s9, 3
    %p110 = por %p108, %p109
    %p111 = scmp.ne.s32.totalorder %s103, %s106
    %p112 = scmp.eq.s32.totalorder %s9, 0
    %p113 = por %p111, %p112
    %p114 = scmp.ne.s32.totalorder %s103, %s106
    %p115 = scmp.eq.s32.totalorder %s14, 3
    %p116 = por %p114, %p115
    %p117 = scmp.ne.s32.totalorder %s106, %s107
    %p118 = scmp.eq.s32.totalorder %s14, 0
    %p119 = por %p117, %p118
    %p120 = scmp.ne.s32.totalorder %s106, %s107
    %p121 = scmp.eq.s32.totalorder %s15, 3
    %p122 = por %p120, %p121
    %p124 = scmp.ne.s32.totalorder %s107, %s123
    %p125 = scmp.eq.s32.totalorder %s15, 0
    %p126 = por %p124, %p125
    %p127 = scmp.le.s32.totalorder 1, %s9
    %p128 = scmp.lt.s32.totalorder %s9, 5
    %p129 = pnand %p127, %p128
    %p130 = pneg %p129
    // Predicated region
    $region9: #{_lambda_.9} parent=5 // pred_check
      _
    $region10: #{_lambda_.9} parent=5 // pred_check_branch
      %132 = sbr.rel (%p129) target = $region12
    $region11: #{_lambda_.9} parent=5 // pred_region
      %s133 = ssub.s32 %s9, 1
      // Predicated region
      $region13: #{_lambda_.9} parent=11 // pred_check
        %p134 = pneg %p70
      $region14: #{_lambda_.9} parent=11 // pred_check_branch
        %136 = sbr.rel (%p134) target = $region16
      $region15: #{_lambda_.9} parent=11 // pred_region
        _
      $region16: #{_lambda_.9} parent=11 // pred_fallthru
        _
      // Predicated region
      $region17: #{_lambda_.9} parent=11 // pred_check
        %p137 = pneg %p91
      $region18: #{_lambda_.9} parent=11 // pred_check_branch
        %139 = sbr.rel (%p137) target = $region20
      $region19: #{_lambda_.9} parent=11 // pred_region
        _
      $region20: #{_lambda_.9} parent=11 // pred_fallthru
        _
    $region12: #{_lambda_.9} parent=5 // pred_fallthru
      _
    %p140 = scmp.lt.s32.totalorder %s9, 4
    // Predicated region
    $region21: #{_lambda_.9} parent=5 // pred_check
      %p141 = pneg %p140
    $region22: #{_lambda_.9} parent=5 // pred_check_branch
      %143 = sbr.rel (%p141) target = $region24
    $region23: #{_lambda_.9} parent=5 // pred_region
      // Predicated region
      $region25: #{_lambda_.9} parent=23 // pred_check
        %p144 = pneg %p43
      $region26: #{_lambda_.9} parent=23 // pred_check_branch
        %146 = sbr.rel (%p144) target = $region28
      $region27: #{_lambda_.9} parent=23 // pred_region
        %p147 = scmp.lt.s32.totalorder %s16, 3
        %s148 = scalar_select %p147, %s16, 3
        %p149 = scmp.lt.s32.totalorder %s17, 0
        %s150 = scalar_select %p149, %s17, 0
        %s151 = smul.addr %s148, 2
        %s152 = sadd.s32 %s150, %s151
        %s153 = smul.addr %s152, 8
        %s154 = scalar_lea.vmem %s0, %s153
      $region28: #{_lambda_.9} parent=23 // pred_fallthru
        _
    $region24: #{_lambda_.9} parent=5 // pred_fallthru
      _
    %p155 = scmp.le.s32.totalorder 1, %s9
    %p156 = scmp.lt.s32.totalorder %s9, 5
    %p157 = pnand %p155, %p156
    %p158 = pneg %p157
    // Predicated region
    $region29: #{_lambda_.9} parent=5 // pred_check
      _
    $region30: #{_lambda_.9} parent=5 // pred_check_branch
      %160 = sbr.rel (%p157) target = $region32
    $region31: #{_lambda_.9} parent=5 // pred_region
      %s161 = ssub.s32 %s9, 1
      %p162 = scmp.lt.s32.totalorder %s18, 3
      %s163 = scalar_select %p162, %s18, 3
      %p164 = scmp.lt.s32.totalorder %s19, 0
      %s165 = scalar_select %p164, %s19, 0
      %s166 = smul.addr %s163, 2
      %s167 = sadd.s32 %s165, %s166
      %s168 = smul.addr %s167, 8
      %s169 = scalar_lea.vmem %s0, %s168
      %p170 = pneg %p49
      %p171 = pneg %p46
      %p172 = pneg %p70
      %p173 = pneg %p67
      %p174 = pneg %p91
      %p175 = pneg %p88
      %p176 = pneg %p119
      %p177 = pneg %p116
      %p178 = scmp.lt.s32.totalorder %s18, 3
      %s179 = scalar_select %p178, %s18, 3
      %p180 = scmp.lt.s32.totalorder %s19, 0
      %s181 = scalar_select %p180, %s19, 0
      %s182 = smul.addr %s179, 2
      %s183 = sadd.s32 %s181, %s182
      %s184 = smul.addr %s183, 8
      %s185 = scalar_lea.vmem %s3, %s184
      %p186 = scmp.lt.s32.totalorder %s18, 3
      %s187 = scalar_select %p186, %s18, 3
      %p188 = scmp.lt.s32.totalorder %s19, 0
      %s189 = scalar_select %p188, %s19, 0
      %s190 = smul.addr %s187, 2
      %s191 = sadd.s32 %s189, %s190
      %s192 = smul.addr %s191, 8
      %s193 = scalar_lea.vmem %s0, %s192
      %p194 = scmp.lt.s32.totalorder %s18, 3
      %s195 = scalar_select %p194, %s18, 3
      %p196 = scmp.lt.s32.totalorder %s19, 0
      %s197 = scalar_select %p196, %s19, 0
      %s198 = smul.addr %s195, 2
      %s199 = sadd.s32 %s197, %s198
      %s200 = smul.addr %s199, 8
      %s201 = scalar_lea.vmem %s3, %s200
      %v202 = vld [vmem:[%s193] sm:$0xff]
      %v203 = vld [vmem:[%s193 + $0x8] sm:$0xff]
      %v204 = vld [vmem:[%s1] sm:$0xff]
      %v205 = vld [vmem:[%s1 + $0x8] sm:$0xff]
      %207 = vset.pattern.permute.xlu0 0
      %208 = vperm.xlu0 %207, %v204
      %v209 = vpop.permute.xlu0 %208
      %212 = vset.pattern.permute.xlu0 0
      %213 = vperm.xlu0 %212, %v205
      %v214 = vpop.permute.xlu0 %213
      %v216 = vmul.f32 %v202, %v209
      %v217 = vmul.f32 %v203, %v214
      %v218 = vld [vmem:[%s2] sm:$0xff]
      %v219 = vld [vmem:[%s2 + $0x8] sm:$0xff]
      %221 = vset.pattern.permute.xlu0 0
      %222 = vperm.xlu0 %221, %v218
      %v223 = vpop.permute.xlu0 %222
      %226 = vset.pattern.permute.xlu0 0
      %227 = vperm.xlu0 %226, %v219
      %v228 = vpop.permute.xlu0 %227
      %v230 = vadd.f32 %v216, %v223
      %v231 = vadd.f32 %v217, %v228
      %232 = vst [vmem:[%s201] sm:$0xff] %v230
      %233 = vst [vmem:[%s201 + $0x8] sm:$0xff] %v231
      %p234 = scmp.lt.s32.totalorder %s18, 3
      %s235 = scalar_select %p234, %s18, 3
      %p236 = scmp.lt.s32.totalorder %s19, 0
      %s237 = scalar_select %p236, %s19, 0
      %s238 = smul.addr %s235, 2
      %s239 = sadd.s32 %s237, %s238
      %s240 = smul.addr %s239, 8
      %s241 = scalar_lea.vmem %s3, %s240
      // Predicated region
      $region33: #{_lambda_.9} parent=31 // pred_check
        %p242 = pneg %p116
      $region34: #{_lambda_.9} parent=31 // pred_check_branch
        %244 = sbr.rel (%p242) target = $region36
      $region35: #{_lambda_.9} parent=31 // pred_region
        _
      $region36: #{_lambda_.9} parent=31 // pred_fallthru
        _
    $region32: #{_lambda_.9} parent=5 // pred_fallthru
      _
    %p245 = scmp.le.s32.totalorder 2, %s9
    // Predicated region
    $region37: #{_lambda_.9} parent=5 // pred_check
      %p246 = pneg %p245
    $region38: #{_lambda_.9} parent=5 // pred_check_branch
      %248 = sbr.rel (%p246) target = $region40
    $region39: #{_lambda_.9} parent=5 // pred_region
      %s249 = ssub.s32 %s9, 2
      // Predicated region
      $region41: #{_lambda_.9} parent=39 // pred_check
        %p250 = pneg %p122
      $region42: #{_lambda_.9} parent=39 // pred_check_branch
        %252 = sbr.rel (%p250) target = $region44
      $region43: #{_lambda_.9} parent=39 // pred_region
        %p253 = scmp.lt.s32.totalorder %s20, 3
        %s254 = scalar_select %p253, %s20, 3
        %p255 = scmp.lt.s32.totalorder %s21, 0
        %s256 = scalar_select %p255, %s21, 0
        %s257 = smul.addr %s254, 2
        %s258 = sadd.s32 %s256, %s257
        %s259 = smul.addr %s258, 8
        %s260 = scalar_lea.vmem %s3, %s259
      $region44: #{_lambda_.9} parent=39 // pred_fallthru
        _
    $region40: #{_lambda_.9} parent=5 // pred_fallthru
      _
  $region6: #{_lambda_.9} parent=0 // loop_footer
    %s13 = sadd.s32 1, %s9
  $region7: #{_lambda_.9} parent=0 // loop_footer_branch
    %8 = sbr.rel target = $region3
  $region8: #{_lambda_.9} parent=0 // loop_exit
    _

// kernel: squeeze.78
$region0: #{squeeze.78}
  %s0 = inlined_call_operand.vmem [shape: f32[1,4,32], index: 0, kind: input, shape index: {}]
  %s1 = inlined_call_operand.vmem [shape: f32[4,2,4,4], index: 1, kind: output, shape index: {}]
  $region1: #{squeeze.78} parent=0
    #allocation0 [shape = 'u8[32768]{0}', space=vmem, size = 0x8000, scoped, tag = 'scoped mem for output reshape']
    #allocation1 [shape = 'u8[4096]{0}', space=vmem, size = 0x1000, scoped, tag = 'scoped mem for input reshape']
    %s3 = sshllo.u32 0, 4
    %v4 = vld [vmem:[%s0] sm:%s3]
    %5 = vst [vmem:[#allocation1] sm:%s3] %v4
    %v6 = vld [vmem:[#allocation1] sm:$0xf]
    %vm7 = vcmask 31744
    %8 = vst.msk [vmem:[#allocation0] ss:$16 sm:$0x3] %vm7, %v6
    %9 = vst.msk [vmem:[#allocation0] ss:$16 sm:$0xc] %vm7, %v6
    %v10 = vld [vmem:[#allocation1] sm:$0xf]
    %11 = vrot.lane.b32.xlu0 %v10, 124
    %v12 = vpop.permute.xlu0 %11
    %vm13 = vcmask 31744
    %s14 = scalar_lea.vmem [#allocation0], 1
    %15 = vst.msk [vmem:[%s14] ss:$16 sm:$0x3] %vm13, %v12
    %s16 = scalar_lea.vmem [#allocation0], 1
    %17 = vst.msk [vmem:[%s16] ss:$16 sm:$0xc] %vm13, %v12
    %v18 = vld [vmem:[#allocation1] sm:$0xf]
    %19 = vrot.lane.b32.xlu0 %v18, 120
    %v20 = vpop.permute.xlu0 %19
    %vm21 = vcmask 31744
    %s22 = scalar_lea.vmem [#allocation0], 2
    %23 = vst.msk [vmem:[%s22] ss:$16 sm:$0x3] %vm21, %v20
    %s24 = scalar_lea.vmem [#allocation0], 2
    %25 = vst.msk [vmem:[%s24] ss:$16 sm:$0xc] %vm21, %v20
    %v26 = vld [vmem:[#allocation1] sm:$0xf]
    %27 = vrot.lane.b32.xlu0 %v26, 116
    %v28 = vpop.permute.xlu0 %27
    %vm29 = vcmask 31744
    %s30 = scalar_lea.vmem [#allocation0], 3
    %31 = vst.msk [vmem:[%s30] ss:$16 sm:$0x3] %vm29, %v28
    %s32 = scalar_lea.vmem [#allocation0], 3
    %33 = vst.msk [vmem:[%s32] ss:$16 sm:$0xc] %vm29, %v28
    %v34 = vld [vmem:[#allocation1] sm:$0xf]
    %35 = vrot.lane.b32.xlu0 %v34, 112
    %v36 = vpop.permute.xlu0 %35
    %vm37 = vcmask 31744
    %s38 = scalar_lea.vmem [#allocation0], 8
    %39 = vst.msk [vmem:[%s38] ss:$16 sm:$0x3] %vm37, %v36
    %s40 = scalar_lea.vmem [#allocation0], 8
    %41 = vst.msk [vmem:[%s40] ss:$16 sm:$0xc] %vm37, %v36
    %v42 = vld [vmem:[#allocation1] sm:$0xf]
    %43 = vrot.lane.b32.xlu0 %v42, 108
    %v44 = vpop.permute.xlu0 %43
    %vm45 = vcmask 31744
    %s46 = scalar_lea.vmem [#allocation0], 9
    %47 = vst.msk [vmem:[%s46] ss:$16 sm:$0x3] %vm45, %v44
    %s48 = scalar_lea.vmem [#allocation0], 9
    %49 = vst.msk [vmem:[%s48] ss:$16 sm:$0xc] %vm45, %v44
    %v50 = vld [vmem:[#allocation1] sm:$0xf]
    %51 = vrot.lane.b32.xlu0 %v50, 104
    %v52 = vpop.permute.xlu0 %51
    %vm53 = vcmask 31744
    %s54 = scalar_lea.vmem [#allocation0], 10
    %55 = vst.msk [vmem:[%s54] ss:$16 sm:$0x3] %vm53, %v52
    %s56 = scalar_lea.vmem [#allocation0], 10
    %57 = vst.msk [vmem:[%s56] ss:$16 sm:$0xc] %vm53, %v52
    %v58 = vld [vmem:[#allocation1] sm:$0xf]
    %59 = vrot.lane.b32.xlu0 %v58, 100
    %v60 = vpop.permute.xlu0 %59
    %vm61 = vcmask 31744
    %s62 = scalar_lea.vmem [#allocation0], 11
    %63 = vst.msk [vmem:[%s62] ss:$16 sm:$0x3] %vm61, %v60
    %s64 = scalar_lea.vmem [#allocation0], 11
    %65 = vst.msk [vmem:[%s64] ss:$16 sm:$0xc] %vm61, %v60
    %s67 = sshllo.u32 0, 4
    %v69 = vld [vmem:[#allocation0] sm:%s67]
    %s70 = sshllo.u32 0, 4
    %71 = vst [vmem:[%s1] sm:%s70] %v69
    %s72 = scalar_lea.vmem [#allocation0], 8
    %v73 = vld [vmem:[%s72] sm:%s67]
    %s74 = sshllo.u32 0, 4
    %s75 = scalar_lea.vmem %s1, 4
    %76 = vst [vmem:[%s75] sm:%s74] %v73
    %s77 = scalar_lea.vmem [#allocation0], 16
    %v78 = vld [vmem:[%s77] sm:%s67]
    %s79 = sshllo.u32 0, 4
    %s80 = smul.addr 4, 2
    %s81 = scalar_lea.vmem %s1, %s80
    %82 = vst [vmem:[%s81] sm:%s79] %v78
    %s83 = scalar_lea.vmem [#allocation0], 24
    %v84 = vld [vmem:[%s83] sm:%s67]
    %s85 = sshllo.u32 0, 4
    %s86 = smul.addr 4, 3
    %s87 = scalar_lea.vmem %s1, %s86
    %88 = vst [vmem:[%s87] sm:%s85] %v84
    %s89 = scalar_lea.vmem [#allocation0], 32
    %v90 = vld [vmem:[%s89] sm:%s67]
    %s91 = sshllo.u32 0, 4
    %s92 = smul.addr 4, 4
    %s93 = scalar_lea.vmem %s1, %s92
    %94 = vst [vmem:[%s93] sm:%s91] %v90
    %s95 = scalar_lea.vmem [#allocation0], 40
    %v96 = vld [vmem:[%s95] sm:%s67]
    %s97 = sshllo.u32 0, 4
    %s98 = smul.addr 4, 5
    %s99 = scalar_lea.vmem %s1, %s98
    %100 = vst [vmem:[%s99] sm:%s97] %v96
    %s101 = scalar_lea.vmem [#allocation0], 48
    %v102 = vld [vmem:[%s101] sm:%s67]
    %s103 = sshllo.u32 0, 4
    %s104 = smul.addr 4, 6
    %s105 = scalar_lea.vmem %s1, %s104
    %106 = vst [vmem:[%s105] sm:%s103] %v102
    %s107 = scalar_lea.vmem [#allocation0], 56
    %v108 = vld [vmem:[%s107] sm:%s67]
    %s109 = sshllo.u32 0, 4
    %s110 = smul.addr 4, 7
    %s111 = scalar_lea.vmem %s1, %s110
    %112 = vst [vmem:[%s111] sm:%s109] %v108

// kernel: _lambda_.10
$region0: #{_lambda_.10}
  #allocation0 [shape = 'u32[]', space=smem, size = 0x4, offset = 0x4, fixed_abs, tag = 'smem constant byte address 0x4 - core index']
  #allocation1 [shape = 'u32[144,128]{1,0:T(1,128)}', space=vmem, size = 0x12000, scoped, tag = 'internal scratch']
  %s0 = inlined_call_operand.vmem [shape: bf16[4,16,32], index: 0, kind: input, shape index: {}]
  %s1 = inlined_call_operand.vmem [shape: bf16[4,32,128], index: 1, kind: input, shape index: {}]
  %s2 = inlined_call_operand.vmem [shape: f32[4,16,128], index: 2, kind: output, shape index: {0}]
  %s3 = inlined_call_operand.vmem [shape: f32[4,1,16,1], index: 3, kind: output, shape index: {1}]
  %s4 = inlined_call_operand.vmem [shape: f32[4,1,16,1], index: 4, kind: output, shape index: {2}]
  %5 = xla_tuple %s2, %s3, %s4
  %s6 = sld [smem:[#allocation0]]
  $region57: #{_lambda_.10} parent=0
    _
  %s8 = ssub.s32 1, %s6
  %s9 = scalar_select 0, %s8, %s6
  loop: start=0, step=1, limit=6
  $region2: #{_lambda_.10} parent=0 // loop_pre_header
    _
  $region3: #{_lambda_.10} parent=0 // loop_header
    %s11 = sphi 0, %s15
    %p12 = scmp.ge.s32.totalorder %s11, 6
    %s18 = sphi 0, %s30
    %s19 = sphi 0, %s26
    %s20 = sphi 0, %s18
    %s21 = sphi 0, %s19
    %s22 = sphi 0, %s20
    %s23 = sphi 0, %s21
    %s33 = sphi 0, %s35
    %s36 = sphi 0, %s33
    %s37 = sphi 0, %s36
    %s53 = sphi 0, %s37
    %s61 = sphi 0, %s63
    %s64 = sphi 0, %s61
    %s65 = sphi 0, %s64
    %s81 = sphi 0, %s65
    %s89 = sphi 0, %s91
    %s92 = sphi 0, %s89
    %s93 = sphi 0, %s92
    %s109 = sphi 0, %s93
    %s117 = sphi 0, %s119
    %s120 = sphi 0, %s117
    %s121 = sphi 0, %s120
    %s137 = sphi 0, %s121
    %s145 = sphi 0, %s147
    %s148 = sphi 0, %s145
    %s149 = sphi 0, %s148
    %s165 = sphi 0, %s149
  $region4: #{_lambda_.10} parent=0 // loop_header_branch
    %14 = sbr.rel (%p12) target = $region8
  $region5: #{_lambda_.10} parent=0 // loop_body
    %s16 = ssub.s32 %s11, 1
    %s17 = ssub.s32 %s11, 2
    %s24 = sadd.s32 1, %s19
    %p25 = scmp.ge.s32.totalorder %s24, 1
    %s26 = scalar_select %p25, 0, %s24
    %s27 = sadd.s32 1, %s18
    %s28 = scalar_select %p25, %s27, %s18
    %p29 = scmp.ge.s32.totalorder %s28, 4
    %s30 = scalar_select %p29, 0, %s28
    %s31 = ssub.s32 %s18, %s30
    %p32 = scmp.eq.s32.totalorder %s31, 0
    %s34 = sadd.s32 %s33, 1
    %s35 = scalar_select %p32, %s33, %s34
    %p38 = pneg %p32
    %p39 = scmp.eq.s32.totalorder %s11, 3
    %p40 = por %p38, %p39
    %p41 = scmp.ne.s32.totalorder %s33, %s36
    %p42 = scmp.eq.s32.totalorder %s11, 0
    %p43 = por %p41, %p42
    %p44 = scmp.ne.s32.totalorder %s33, %s36
    %p45 = scmp.eq.s32.totalorder %s16, 3
    %p46 = por %p44, %p45
    %p47 = scmp.ne.s32.totalorder %s36, %s37
    %p48 = scmp.eq.s32.totalorder %s16, 0
    %p49 = por %p47, %p48
    %p50 = scmp.ne.s32.totalorder %s36, %s37
    %p51 = scmp.eq.s32.totalorder %s17, 3
    %p52 = por %p50, %p51
    %p54 = scmp.ne.s32.totalorder %s37, %s53
    %p55 = scmp.eq.s32.totalorder %s17, 0
    %p56 = por %p54, %p55
    %s57 = ssub.s32 %s18, %s30
    %s58 = ssub.s32 %s19, %s26
    %s59 = sor.u32 %s57, %s58
    %p60 = scmp.eq.s32.totalorder %s59, 0
    %s62 = sadd.s32 %s61, 1
    %s63 = scalar_select %p60, %s61, %s62
    %p66 = pneg %p60
    %p67 = scmp.eq.s32.totalorder %s11, 3
    %p68 = por %p66, %p67
    %p69 = scmp.ne.s32.totalorder %s61, %s64
    %p70 = scmp.eq.s32.totalorder %s11, 0
    %p71 = por %p69, %p70
    %p72 = scmp.ne.s32.totalorder %s61, %s64
    %p73 = scmp.eq.s32.totalorder %s16, 3
    %p74 = por %p72, %p73
    %p75 = scmp.ne.s32.totalorder %s64, %s65
    %p76 = scmp.eq.s32.totalorder %s16, 0
    %p77 = por %p75, %p76
    %p78 = scmp.ne.s32.totalorder %s64, %s65
    %p79 = scmp.eq.s32.totalorder %s17, 3
    %p80 = por %p78, %p79
    %p82 = scmp.ne.s32.totalorder %s65, %s81
    %p83 = scmp.eq.s32.totalorder %s17, 0
    %p84 = por %p82, %p83
    %s85 = ssub.s32 %s18, %s30
    %s86 = ssub.s32 %s19, %s26
    %s87 = sor.u32 %s85, %s86
    %p88 = scmp.eq.s32.totalorder %s87, 0
    %s90 = sadd.s32 %s89, 1
    %s91 = scalar_select %p88, %s89, %s90
    %p94 = pneg %p88
    %p95 = scmp.eq.s32.totalorder %s11, 3
    %p96 = por %p94, %p95
    %p97 = scmp.ne.s32.totalorder %s89, %s92
    %p98 = scmp.eq.s32.totalorder %s11, 0
    %p99 = por %p97, %p98
    %p100 = scmp.ne.s32.totalorder %s89, %s92
    %p101 = scmp.eq.s32.totalorder %s16, 3
    %p102 = por %p100, %p101
    %p103 = scmp.ne.s32.totalorder %s92, %s93
    %p104 = scmp.eq.s32.totalorder %s16, 0
    %p105 = por %p103, %p104
    %p106 = scmp.ne.s32.totalorder %s92, %s93
    %p107 = scmp.eq.s32.totalorder %s17, 3
    %p108 = por %p106, %p107
    %p110 = scmp.ne.s32.totalorder %s93, %s109
    %p111 = scmp.eq.s32.totalorder %s17, 0
    %p112 = por %p110, %p111
    %s113 = ssub.s32 %s18, %s30
    %s114 = ssub.s32 %s19, %s26
    %s115 = sor.u32 %s113, %s114
    %p116 = scmp.eq.s32.totalorder %s115, 0
    %s118 = sadd.s32 %s117, 1
    %s119 = scalar_select %p116, %s117, %s118
    %p122 = pneg %p116
    %p123 = scmp.eq.s32.totalorder %s11, 3
    %p124 = por %p122, %p123
    %p125 = scmp.ne.s32.totalorder %s117, %s120
    %p126 = scmp.eq.s32.totalorder %s11, 0
    %p127 = por %p125, %p126
    %p128 = scmp.ne.s32.totalorder %s117, %s120
    %p129 = scmp.eq.s32.totalorder %s16, 3
    %p130 = por %p128, %p129
    %p131 = scmp.ne.s32.totalorder %s120, %s121
    %p132 = scmp.eq.s32.totalorder %s16, 0
    %p133 = por %p131, %p132
    %p134 = scmp.ne.s32.totalorder %s120, %s121
    %p135 = scmp.eq.s32.totalorder %s17, 3
    %p136 = por %p134, %p135
    %p138 = scmp.ne.s32.totalorder %s121, %s137
    %p139 = scmp.eq.s32.totalorder %s17, 0
    %p140 = por %p138, %p139
    %s141 = ssub.s32 %s18, %s30
    %s142 = ssub.s32 %s19, %s26
    %s143 = sor.u32 %s141, %s142
    %p144 = scmp.eq.s32.totalorder %s143, 0
    %s146 = sadd.s32 %s145, 1
    %s147 = scalar_select %p144, %s145, %s146
    %p150 = pneg %p144
    %p151 = scmp.eq.s32.totalorder %s11, 3
    %p152 = por %p150, %p151
    %p153 = scmp.ne.s32.totalorder %s145, %s148
    %p154 = scmp.eq.s32.totalorder %s11, 0
    %p155 = por %p153, %p154
    %p156 = scmp.ne.s32.totalorder %s145, %s148
    %p157 = scmp.eq.s32.totalorder %s16, 3
    %p158 = por %p156, %p157
    %p159 = scmp.ne.s32.totalorder %s148, %s149
    %p160 = scmp.eq.s32.totalorder %s16, 0
    %p161 = por %p159, %p160
    %p162 = scmp.ne.s32.totalorder %s148, %s149
    %p163 = scmp.eq.s32.totalorder %s17, 3
    %p164 = por %p162, %p163
    %p166 = scmp.ne.s32.totalorder %s149, %s165
    %p167 = scmp.eq.s32.totalorder %s17, 0
    %p168 = por %p166, %p167
    %p169 = scmp.le.s32.totalorder 1, %s11
    %p170 = scmp.lt.s32.totalorder %s11, 5
    %p171 = pnand %p169, %p170
    %p172 = pneg %p171
    // Predicated region
    $region9: #{_lambda_.10} parent=5 // pred_check
      _
    $region10: #{_lambda_.10} parent=5 // pred_check_branch
      %174 = sbr.rel (%p171) target = $region12
    $region11: #{_lambda_.10} parent=5 // pred_region
      %s175 = ssub.s32 %s11, 1
    $region12: #{_lambda_.10} parent=5 // pred_fallthru
      _
    %p176 = scmp.lt.s32.totalorder %s11, 4
    // Predicated region
    $region13: #{_lambda_.10} parent=5 // pred_check
      %p177 = pneg %p176
    $region14: #{_lambda_.10} parent=5 // pred_check_branch
      %179 = sbr.rel (%p177) target = $region16
    $region15: #{_lambda_.10} parent=5 // pred_region
      // Predicated region
      $region17: #{_lambda_.10} parent=15 // pred_check
        %p180 = pneg %p43
      $region18: #{_lambda_.10} parent=15 // pred_check_branch
        %182 = sbr.rel (%p180) target = $region20
      $region19: #{_lambda_.10} parent=15 // pred_region
        %p183 = scmp.lt.s32.totalorder %s18, 3
        %s184 = scalar_select %p183, %s18, 3
        %s185 = smul.addr %s184, 2
        %s186 = smul.addr %s185, 4
        %s187 = scalar_lea.vmem %s0, %s186
      $region20: #{_lambda_.10} parent=15 // pred_fallthru
        _
      // Predicated region
      $region21: #{_lambda_.10} parent=15 // pred_check
        %p188 = pneg %p71
      $region22: #{_lambda_.10} parent=15 // pred_check_branch
        %190 = sbr.rel (%p188) target = $region24
      $region23: #{_lambda_.10} parent=15 // pred_region
        %p191 = scmp.lt.s32.totalorder %s18, 3
        %s192 = scalar_select %p191, %s18, 3
        %p193 = scmp.lt.s32.totalorder %s19, 0
        %s194 = scalar_select %p193, %s19, 0
        %s195 = smul.addr %s192, 4
        %s196 = sadd.s32 %s194, %s195
        %s197 = smul.addr %s196, 4
        %s198 = scalar_lea.vmem %s1, %s197
      $region24: #{_lambda_.10} parent=15 // pred_fallthru
        _
    $region16: #{_lambda_.10} parent=5 // pred_fallthru
      _
    %p199 = scmp.le.s32.totalorder 1, %s11
    %p200 = scmp.lt.s32.totalorder %s11, 5
    %p201 = pnand %p199, %p200
    %p202 = pneg %p201
    // Predicated region
    $region25: #{_lambda_.10} parent=5 // pred_check
      _
    $region26: #{_lambda_.10} parent=5 // pred_check_branch
      %204 = sbr.rel (%p201) target = $region28
    $region27: #{_lambda_.10} parent=5 // pred_region
      %s205 = ssub.s32 %s11, 1
      %p206 = scmp.lt.s32.totalorder %s20, 3
      %s207 = scalar_select %p206, %s20, 3
      %s208 = smul.addr %s207, 2
      %s209 = smul.addr %s208, 4
      %s210 = scalar_lea.vmem %s0, %s209
      %p211 = pneg %p49
      %p212 = pneg %p46
      %p213 = scmp.lt.s32.totalorder %s20, 3
      %s214 = scalar_select %p213, %s20, 3
      %p215 = scmp.lt.s32.totalorder %s21, 0
      %s216 = scalar_select %p215, %s21, 0
      %s217 = smul.addr %s214, 4
      %s218 = sadd.s32 %s216, %s217
      %s219 = smul.addr %s218, 4
      %s220 = scalar_lea.vmem %s1, %s219
      %p221 = pneg %p77
      %p222 = pneg %p74
      %p223 = pneg %p105
      %p224 = pneg %p102
      %p225 = scmp.lt.s32.totalorder %s20, 3
      %s226 = scalar_select %p225, %s20, 3
      %p227 = scmp.lt.s32.totalorder %s21, 0
      %s228 = scalar_select %p227, %s21, 0
      %s229 = smul.addr %s226, 2
      %s230 = sadd.s32 %s228, %s229
      %s231 = smul.addr %s230, 8
      %s232 = scalar_lea.vmem %s2, %s231
      %p233 = pneg %p133
      %p234 = pneg %p130
      %p235 = scmp.lt.s32.totalorder %s20, 3
      %s236 = scalar_select %p235, %s20, 3
      %p237 = scmp.lt.s32.totalorder %s21, 0
      %s238 = scalar_select %p237, %s21, 0
      %s239 = smul.addr %s238, 2
      %s240 = smul.addr %s236, 2
      %s241 = sadd.s32 %s239, %s240
      %s242 = smul.addr %s241, 8
      %s243 = scalar_lea.vmem %s3, %s242
      %p244 = pneg %p161
      %p245 = pneg %p158
      %p246 = scmp.lt.s32.totalorder %s20, 3
      %s247 = scalar_select %p246, %s20, 3
      %p248 = scmp.lt.s32.totalorder %s21, 0
      %s249 = scalar_select %p248, %s21, 0
      %s250 = smul.addr %s249, 2
      %s251 = smul.addr %s247, 2
      %s252 = sadd.s32 %s250, %s251
      %s253 = smul.addr %s252, 8
      %s254 = scalar_lea.vmem %s4, %s253
      %p255 = scmp.lt.s32.totalorder %s20, 3
      %s256 = scalar_select %p255, %s20, 3
      %s257 = smul.addr %s256, 2
      %s258 = smul.addr %s257, 4
      %s259 = scalar_lea.vmem %s0, %s258
      %p260 = scmp.lt.s32.totalorder %s20, 3
      %s261 = scalar_select %p260, %s20, 3
      %p262 = scmp.lt.s32.totalorder %s21, 0
      %s263 = scalar_select %p262, %s21, 0
      %s264 = smul.addr %s261, 4
      %s265 = sadd.s32 %s263, %s264
      %s266 = smul.addr %s265, 4
      %s267 = scalar_lea.vmem %s1, %s266
      %p268 = scmp.lt.s32.totalorder %s20, 3
      %s269 = scalar_select %p268, %s20, 3
      %p270 = scmp.lt.s32.totalorder %s21, 0
      %s271 = scalar_select %p270, %s21, 0
      %s272 = smul.addr %s269, 2
      %s273 = sadd.s32 %s271, %s272
      %s274 = smul.addr %s273, 8
      %s275 = scalar_lea.vmem %s2, %s274
      %p276 = scmp.lt.s32.totalorder %s20, 3
      %s277 = scalar_select %p276, %s20, 3
      %p278 = scmp.lt.s32.totalorder %s21, 0
      %s279 = scalar_select %p278, %s21, 0
      %s280 = smul.addr %s279, 2
      %s281 = smul.addr %s277, 2
      %s282 = sadd.s32 %s280, %s281
      %s283 = smul.addr %s282, 8
      %s284 = scalar_lea.vmem %s3, %s283
      %p285 = scmp.lt.s32.totalorder %s20, 3
      %s286 = scalar_select %p285, %s20, 3
      %p287 = scmp.lt.s32.totalorder %s21, 0
      %s288 = scalar_select %p287, %s21, 0
      %s289 = smul.addr %s288, 2
      %s290 = smul.addr %s286, 2
      %s291 = sadd.s32 %s289, %s290
      %s292 = smul.addr %s291, 8
      %s293 = scalar_lea.vmem %s4, %s292
      %v295 = vld [vmem:[%s259] sm:$0xf]
      %v296 = vld [vmem:[%s259 + $0x4] sm:$0xf]
      %v297 = vld [vmem:[%s267] sm:$0xf]
      %v298 = vld [vmem:[%s267 + $0x4] sm:$0xf]
      %v299 = vld [vmem:[%s267 + $0x8] sm:$0xf]
      %v300 = vld [vmem:[%s267 + $0xc] sm:$0xf]
      %v303 = vunpack.c.l.b16 %v295
      %v304 = vunpack.c.l.b16 %v296
      %v305 = vpack.c.b16 %v304, %v303
      %v310 = vunpack.c.l.b16 %v297
      %v311 = vunpack.c.l.b16 %v298
      %v312 = vunpack.c.l.b16 %v299
      %v313 = vunpack.c.l.b16 %v300
      %v314 = vpack.c.b16 %v311, %v310
      %v315 = vpack.c.b16 %v313, %v312
      %vm318 = vcmask 261120
      %v320 = vsel %vm318, %v305, 0
      %322 = vmatprep.subr.bf16.mxu0 0
      %323 = vmatpush1.bf16.msra.mxu0 %v314
      %324 = vmatprep.subr.bf16.mxu0 0
      %325 = vmatpush1.bf16.msra.mxu0 %v315
      %326 = vmatprep.subr.bf16.mxu0 0
      %327 = vmatpush1.bf16.msra.mxu0 0
      %328 = vmatprep.subr.bf16.mxu0 0
      %329 = vmatpush1.bf16.msra.mxu0 0
      %330 = vmatprep.subr.bf16.mxu0 0
      %331 = vmatpush1.bf16.msra.mxu0 0
      %332 = vmatprep.subr.bf16.mxu0 0
      %333 = vmatpush1.bf16.msra.mxu0 0
      %334 = vmatprep.subr.bf16.mxu0 0
      %335 = vmatpush1.bf16.msra.mxu0 0
      %336 = vmatprep.subr.bf16.mxu0 0
      %337 = vmatpush1.bf16.msra.mxu0 0
      %338 = vmatprep.subr.bf16.mxu0 0
      %339 = vmatpush1.bf16.msra.mxu0 0
      %340 = vmatprep.subr.bf16.mxu0 0
      %341 = vmatpush1.bf16.msra.mxu0 0
      %342 = vmatprep.subr.bf16.mxu0 0
      %343 = vmatpush1.bf16.msra.mxu0 0
      %344 = vmatprep.subr.bf16.mxu0 0
      %345 = vmatpush1.bf16.msra.mxu0 0
      %346 = vmatprep.subr.bf16.mxu0 0
      %347 = vmatpush1.bf16.msra.mxu0 0
      %348 = vmatprep.subr.bf16.mxu0 0
      %349 = vmatpush1.bf16.msra.mxu0 0
      %350 = vmatprep.subr.bf16.mxu0 0
      %351 = vmatpush1.bf16.msra.mxu0 0
      %352 = vmatprep.subr.bf16.mxu0 0
      %353 = vmatpush1.bf16.msra.mxu0 0
      %354 = vmatprep.mubr.bf16.mxu0 0
      %355 = vmatmul.mubr.bf16.gmra.mrb[0].mxu0 %v320
      %v356 = vpop.f32.mrb[0].mxu0
      %v357 = vadd.f32 0.0, %v356
      %v358 = vpop.f32.mrb[0].mxu0
      %v359 = vpop.f32.mrb[0].mxu0
      %v360 = vadd.f32 0.0, %v359
      %v361 = vpop.f32.mrb[0].mxu0
      %362 = vdwg.mxu0
      %vm363 = vcmp.ge.f32.partialorder %v357, 0.0
      %vm364 = vcmp.ge.f32.partialorder %v360, 0.0
      %v365 = vmul.f32 %v357, 0.2
      %v366 = vmul.f32 %v360, 0.2
      %v367 = vsel %vm363, %v357, %v365
      %v368 = vsel %vm364, %v360, %v366
      %369 = vst [vmem:[%s275] sm:$0xff] %v367
      %370 = vst [vmem:[%s275 + $0x8] sm:$0xff] %v368
      %371 = vadd.xlane.f32.xlu0 %v367
      %v372 = vpop.xlane.xlu0 %371
      %373 = vadd.xlane.f32.xlu0 %v368
      %v374 = vpop.xlane.xlu0 %373
      %vm375 = vcmask 7168
      %376 = vst.msk [vmem:[%s284] sm:$0xff] %vm375, %v372
      %377 = vst.msk [vmem:[%s284 + $0x8] sm:$0xff] %vm375, %v374
      %v378 = vmul.f32 %v367, %v367
      %v379 = vmul.f32 %v368, %v368
      %380 = vadd.xlane.f32.xlu0 %v378
      %v381 = vpop.xlane.xlu0 %380
      %382 = vadd.xlane.f32.xlu0 %v379
      %v383 = vpop.xlane.xlu0 %382
      %384 = vst.msk [vmem:[%s293] sm:$0xff] %vm375, %v381
      %385 = vst.msk [vmem:[%s293 + $0x8] sm:$0xff] %vm375, %v383
      %p386 = scmp.lt.s32.totalorder %s20, 3
      %s387 = scalar_select %p386, %s20, 3
      %p388 = scmp.lt.s32.totalorder %s21, 0
      %s389 = scalar_select %p388, %s21, 0
      %s390 = smul.addr %s387, 2
      %s391 = sadd.s32 %s389, %s390
      %s392 = smul.addr %s391, 8
      %s393 = scalar_lea.vmem %s2, %s392
      %p394 = scmp.lt.s32.totalorder %s20, 3
      %s395 = scalar_select %p394, %s20, 3
      %p396 = scmp.lt.s32.totalorder %s21, 0
      %s397 = scalar_select %p396, %s21, 0
      %s398 = smul.addr %s397, 2
      %s399 = smul.addr %s395, 2
      %s400 = sadd.s32 %s398, %s399
      %s401 = smul.addr %s400, 8
      %s402 = scalar_lea.vmem %s3, %s401
      %p403 = scmp.lt.s32.totalorder %s20, 3
      %s404 = scalar_select %p403, %s20, 3
      %p405 = scmp.lt.s32.totalorder %s21, 0
      %s406 = scalar_select %p405, %s21, 0
      %s407 = smul.addr %s406, 2
      %s408 = smul.addr %s404, 2
      %s409 = sadd.s32 %s407, %s408
      %s410 = smul.addr %s409, 8
      %s411 = scalar_lea.vmem %s4, %s410
      // Predicated region
      $region29: #{_lambda_.10} parent=27 // pred_check
        %p412 = pneg %p102
      $region30: #{_lambda_.10} parent=27 // pred_check_branch
        %414 = sbr.rel (%p412) target = $region32
      $region31: #{_lambda_.10} parent=27 // pred_region
        _
      $region32: #{_lambda_.10} parent=27 // pred_fallthru
        _
      // Predicated region
      $region33: #{_lambda_.10} parent=27 // pred_check
        %p415 = pneg %p130
      $region34: #{_lambda_.10} parent=27 // pred_check_branch
        %417 = sbr.rel (%p415) target = $region36
      $region35: #{_lambda_.10} parent=27 // pred_region
        _
      $region36: #{_lambda_.10} parent=27 // pred_fallthru
        _
      // Predicated region
      $region37: #{_lambda_.10} parent=27 // pred_check
        %p418 = pneg %p158
      $region38: #{_lambda_.10} parent=27 // pred_check_branch
        %420 = sbr.rel (%p418) target = $region40
      $region39: #{_lambda_.10} parent=27 // pred_region
        _
      $region40: #{_lambda_.10} parent=27 // pred_fallthru
        _
    $region28: #{_lambda_.10} parent=5 // pred_fallthru
      _
    %p421 = scmp.le.s32.totalorder 2, %s11
    // Predicated region
    $region41: #{_lambda_.10} parent=5 // pred_check
      %p422 = pneg %p421
    $region42: #{_lambda_.10} parent=5 // pred_check_branch
      %424 = sbr.rel (%p422) target = $region44
    $region43: #{_lambda_.10} parent=5 // pred_region
      %s425 = ssub.s32 %s11, 2
      // Predicated region
      $region45: #{_lambda_.10} parent=43 // pred_check
        %p426 = pneg %p108
      $region46: #{_lambda_.10} parent=43 // pred_check_branch
        %428 = sbr.rel (%p426) target = $region48
      $region47: #{_lambda_.10} parent=43 // pred_region
        %p429 = scmp.lt.s32.totalorder %s22, 3
        %s430 = scalar_select %p429, %s22, 3
        %p431 = scmp.lt.s32.totalorder %s23, 0
        %s432 = scalar_select %p431, %s23, 0
        %s433 = smul.addr %s430, 2
        %s434 = sadd.s32 %s432, %s433
        %s435 = smul.addr %s434, 8
        %s436 = scalar_lea.vmem %s2, %s435
      $region48: #{_lambda_.10} parent=43 // pred_fallthru
        _
      // Predicated region
      $region49: #{_lambda_.10} parent=43 // pred_check
        %p437 = pneg %p136
      $region50: #{_lambda_.10} parent=43 // pred_check_branch
        %439 = sbr.rel (%p437) target = $region52
      $region51: #{_lambda_.10} parent=43 // pred_region
        %p440 = scmp.lt.s32.totalorder %s22, 3
        %s441 = scalar_select %p440, %s22, 3
        %p442 = scmp.lt.s32.totalorder %s23, 0
        %s443 = scalar_select %p442, %s23, 0
        %s444 = smul.addr %s443, 2
        %s445 = smul.addr %s441, 2
        %s446 = sadd.s32 %s444, %s445
        %s447 = smul.addr %s446, 8
        %s448 = scalar_lea.vmem %s3, %s447
      $region52: #{_lambda_.10} parent=43 // pred_fallthru
        _
      // Predicated region
      $region53: #{_lambda_.10} parent=43 // pred_check
        %p449 = pneg %p164
      $region54: #{_lambda_.10} parent=43 // pred_check_branch
        %451 = sbr.rel (%p449) target = $region56
      $region55: #{_lambda_.10} parent=43 // pred_region
        %p452 = scmp.lt.s32.totalorder %s22, 3
        %s453 = scalar_select %p452, %s22, 3
        %p454 = scmp.lt.s32.totalorder %s23, 0
        %s455 = scalar_select %p454, %s23, 0
        %s456 = smul.addr %s455, 2
        %s457 = smul.addr %s453, 2
        %s458 = sadd.s32 %s456, %s457
        %s459 = smul.addr %s458, 8
        %s460 = scalar_lea.vmem %s4, %s459
      $region56: #{_lambda_.10} parent=43 // pred_fallthru
        _
    $region44: #{_lambda_.10} parent=5 // pred_fallthru
      _
  $region6: #{_lambda_.10} parent=0 // loop_footer
    %s15 = sadd.s32 1, %s11
  $region7: #{_lambda_.10} parent=0 // loop_footer_branch
    %10 = sbr.rel target = $region3
  $region8: #{_lambda_.10} parent=0 // loop_exit
    _

</llo_original>
